<compile_context>
chip_gen: v7x
topology: tpu7x:2x2x1
jax: 0.10.0
libtpu: 0.0.40
codegen_flags: <defaults>
</compile_context>

<pallas_src>
import functools

import jax
import jax.numpy as jnp
import numpy as np
from jax import lax
from jax.experimental import pallas as pl
from jax.experimental.pallas import tpu as pltpu


def _ckd_kernel(s_ref, t_ref, oh_ref, invt_ref, wkd_ref, selr_ref, selc_ref, bdm_ref,
                out_ref, *, temp_range, lambda_1, lambda_2, alpha):
    s = s_ref[...]                      # [B, C]  student logits (f32, cast in wrapper)
    t = t_ref[...]                      # [B, C]  teacher logits
    B, C = s.shape
    T = temp_range - 1                  # temperatures 1 .. temp_range-1
    TC = T * C                          # cube width per model
    W = 2 * TC                          # fused width (student temps | teacher temps)

    # ---- fused, lane-packed scaled logits ----------------------------------------
    # cols [k*C:(k+1)*C]       = (s - rowmax(s)) / (k+1)   (student, temp k+1)
    # cols [TC+k*C:TC+(k+1)*C] = (t - rowmax(t)) / (k+1)   (teacher, temp k+1)
    s_c = s - jnp.max(s, axis=1, keepdims=True)
    t_c = t - jnp.max(t, axis=1, keepdims=True)
    a = jnp.concatenate([s_c] * T + [t_c] * T, axis=1) * invt_ref[...]     # [B, W]

    # ---- one exp / one segmented partition function / one log for all 10 softmaxes
    e = jnp.exp(a)
    lane = lax.broadcasted_iota(jnp.int32, (B, W), 1)

    def rotl(x, k):
        # circular lane rotate-left by k: out[:, j] = x[:, (j + k) % W]
        # (slice + concatenate lowers to a lane rotation; unambiguous direction)
        return jnp.concatenate([x[:, k:], x[:, :k]], axis=1)

    # exact aligned-segment (width C=4) sum, broadcast back to every lane:
    pair = e + jnp.where((lane & 1) == 0, rotl(e, 1), rotl(e, W - 1))
    z = pair + jnp.where((lane & 3) < 2, rotl(pair, 2), rotl(pair, W - 2))  # [B, W]
    p = e / z                            # all 10 softmaxes, lane-packed
    logp = a - jnp.log(z)                # all 10 log-softmaxes

    p_s, p_t = p[:, :TC], p[:, TC:]      # student / teacher "cubes"  [B, TC]
    lg_s, lg_t = logp[:, :TC], logp[:, TC:]

    # ---- KD loss (temperature-independent CE folded out of the loop) ---------------
    # ce uses the temp=1 student segment (first C columns); oh_ref is zero elsewhere.
    ce = -jnp.sum(oh_ref[...] * lg_s) / B
    # wkd[j] = alpha * temp(j)^2 / (B*C)  ->  sum_k alpha*k^2 * kl_k in one reduce.
    kd = jnp.sum(wkd_ref[...] * p_t * (lg_t - lg_s))
    loss_kd = kd + T * (1.0 - alpha) * ce

    # ---- loss_l2: exact closed form of sum_{p,q} (s_p s_q - t_p t_q)^2 -------------
    ss = jnp.sum(p_s * p_s)
    tt = jnp.sum(p_t * p_t)
    st = jnp.sum(p_s * p_t)
    loss_l2 = 0.00025 * (ss * ss - 2.0 * st * st + tt * tt)

    # ---- loss_l1: one [N, N] broadcasted |outer(s)-outer(t)| + one reduce ----------
    # Flat row/col views of the cube via masked reductions (any bijective flattening
    # order is valid for a full Cartesian-product sum; row/col orders may differ).
    selr = selr_ref[...]                                   # [B, N]
    selc = selc_ref[...]                                   # [N, TC]
    frow_s = jnp.sum(jnp.concatenate([p_s] * B, axis=1) * selr, axis=0, keepdims=True)
    frow_t = jnp.sum(jnp.concatenate([p_t] * B, axis=1) * selr, axis=0, keepdims=True)
    fcol_s = jnp.sum(jnp.concatenate([p_s] * TC, axis=0) * selc, axis=1, keepdims=True)
    fcol_t = jnp.sum(jnp.concatenate([p_t] * TC, axis=0) * selc, axis=1, keepdims=True)
    diff = fcol_s * frow_s - fcol_t * frow_t               # [N, N] = [160, 160]
    loss_l1 = 0.00025 * jnp.sum(jnp.abs(diff))

    # ---- loss_sub: 4 block-diagonal Grams replace 20 tiny matmuls ------------------
    # tbd[k*B+i, j] = T_k[i, j%C] if j//C == k else 0  (exact zeros off-block), so
    #   tbd @ tbd^T = blockdiag(T_k T_k^T)   and   tbd^T @ tbd = blockdiag(T_k^T T_k).
    bdm = bdm_ref[...]                                     # [T*B, TC]
    tbd = jnp.concatenate([p_t] * T, axis=0) * bdm
    sbd = jnp.concatenate([p_s] * T, axis=0) * bdm
    dn_rr = (((1,), (1,)), ((), ()))                       # X @ X^T  -> [T*B, T*B]
    dn_cc = (((0,), (0,)), ((), ()))                       # X^T @ X  -> [TC, TC]
    gb = (lax.dot_general(tbd, tbd, dn_rr, preferred_element_type=jnp.float32)
          - lax.dot_general(sbd, sbd, dn_rr, preferred_element_type=jnp.float32))
    gc = (lax.dot_general(tbd, tbd, dn_cc, preferred_element_type=jnp.float32)
          - lax.dot_general(sbd, sbd, dn_cc, preferred_element_type=jnp.float32))
    loss_sub = lambda_1 * jnp.sum(gb * gb) + lambda_2 * jnp.sum(gc * gc)

    out_ref[0, 0] = loss_kd + loss_l1 + loss_l2 + loss_sub


def ckd_loss(logits_student, logits_teacher, target,
             temp_range=6, lambda_1=1.0, lambda_2=1.0, alpha=0.7):
    B, C = logits_student.shape
    T = temp_range - 1
    TC = T * C
    W = 2 * TC
    N = B * TC

    # One-hot targets padded to the student-cube width (CE reads the temp=1 segment).
    onehot = jax.nn.one_hot(target, TC, dtype=jnp.float32)                    # [B, TC]

    # Tiny constant tables (built on host; avoids non-power-of-2 int div in-kernel).
    cols = np.arange(W)
    inv_temp = (1.0 / ((cols % TC) // C + 1)).astype(np.float32)[None, :]     # [1, W]
    kcols = np.arange(TC)
    w_kd = (alpha * ((kcols // C) + 1.0) ** 2 / (B * C)).astype(np.float32)[None, :]
    pidx = np.arange(N)
    sel_row = (pidx[None, :] // TC == np.arange(B)[:, None]).astype(np.float32)   # [B, N]
    sel_col = (np.arange(TC)[None, :] == pidx[:, None] // B).astype(np.float32)   # [N, TC]
    bd_mask = (np.arange(T * B)[:, None] // B
               == np.arange(TC)[None, :] // C).astype(np.float32)                 # [T*B, TC]

    kernel = functools.partial(_ckd_kernel, temp_range=temp_range,
                               lambda_1=lambda_1, lambda_2=lambda_2, alpha=alpha)
    out = pl.pallas_call(
        kernel,
        out_shape=jax.ShapeDtypeStruct((1, 1), jnp.float32),
        in_specs=[pl.BlockSpec(memory_space=pltpu.MemorySpace.VMEM)] * 8,
        out_specs=pl.BlockSpec(memory_space=pltpu.MemorySpace.SMEM),
    )(logits_student.astype(jnp.float32), logits_teacher.astype(jnp.float32),
      onehot, jnp.asarray(inv_temp), jnp.asarray(w_kd),
      jnp.asarray(sel_row), jnp.asarray(sel_col), jnp.asarray(bd_mask))
    return out[0, 0]


def reference_ckd_loss(s, t, target, temp_range=6, lambda_1=1.0, lambda_2=1.0, alpha=0.7):
    """Literal numpy re-implementation of the (intended) PyTorch semantics."""
    s = np.asarray(s, dtype=np.float64)
    t = np.asarray(t, dtype=np.float64)
    target = np.asarray(target)
    B, C = s.shape

    def softmax(x):
        x = x - x.max(axis=1, keepdims=True)
        e = np.exp(x)
        return e / e.sum(axis=1, keepdims=True)

    def log_softmax(x):
        x = x - x.max(axis=1, keepdims=True)
        return x - np.log(np.exp(x).sum(axis=1, keepdims=True))

    ce = -np.mean(log_softmax(s)[np.arange(B), target])

    loss_kd = 0.0
    cubes_s, cubes_t = [], []
    for temp in range(1, temp_range):
        ps = softmax(s / temp)
        pt = softmax(t / temp)
        lps = log_softmax(s / temp)
        kl = np.sum(pt * (np.log(pt) - lps)) / (B * C)
        loss_kd += kl * (alpha * temp * temp) + ce * (1.0 - alpha)
        cubes_s.append(ps)
        cubes_t.append(pt)
    cube_s = np.stack(cubes_s, axis=-1)   # [B, C, T]
    cube_t = np.stack(cubes_t, axis=-1)

    stu_scd = np.einsum('ijk,lmn->ijklmn', cube_s, cube_s)
    tea_scd = np.einsum('ijk,lmn->ijklmn', cube_t, cube_t)
    loss_l1 = 0.00025 * np.abs(stu_scd - tea_scd).sum()
    loss_l2 = 0.00025 * ((stu_scd - tea_scd) ** 2).sum()

    scd = tea_scd - stu_scd
    T = temp_range - 1
    loss_sub1 = 0.0
    loss_sub2 = 0.0
    for k in range(T):
        for i in range(B):
            for l in range(B):
                for j in range(C):
                    for m in range(C):
                        loss_sub1 += scd[l, j, k, i, j, k] * scd[l, m, k, i, m, k]
                        loss_sub2 += scd[i, m, k, i, j, k] * scd[l, m, k, l, j, k]
    loss_sub = lambda_1 * loss_sub1 + lambda_2 * loss_sub2
    return loss_kd + loss_l1 + loss_l2 + loss_sub


if __name__ == "__main__":
    B, C = 8, 4   # batch=8 utterances, 4 IEMOCAP emotion classes
    key = jax.random.PRNGKey(0)
    k1, k2, k3 = jax.random.split(key, 3)
    logits_student = jax.random.normal(k1, (B, C), dtype=jnp.float32)
    logits_teacher = jax.random.normal(k2, (B, C), dtype=jnp.float32)
    target = jax.random.randint(k3, (B,), 0, C)

    loss = ckd_loss(logits_student, logits_teacher, target)
    loss = jax.block_until_ready(loss)

    ref = reference_ckd_loss(np.asarray(logits_student), np.asarray(logits_teacher),
                             np.asarray(target))
    np.testing.assert_allclose(float(loss), float(ref), rtol=2e-3, atol=2e-3)
    print("KERNEL_OK")
</pallas_src>

<mosaic_0001>
module attributes {stable_mosaic.version = 11 : i64} {
  func.func @_ckd_kernel(%arg0: memref<8x4xf32, #tpu.memory_space<vmem>>, %arg1: memref<8x4xf32, #tpu.memory_space<vmem>>, %arg2: memref<8x20xf32, #tpu.memory_space<vmem>>, %arg3: memref<1x40xf32, #tpu.memory_space<vmem>>, %arg4: memref<1x20xf32, #tpu.memory_space<vmem>>, %arg5: memref<8x160xf32, #tpu.memory_space<vmem>>, %arg6: memref<160x20xf32, #tpu.memory_space<vmem>>, %arg7: memref<40x20xf32, #tpu.memory_space<vmem>>, %arg8: memref<1x1xf32, #tpu.memory_space<smem>>) attributes {dimension_semantics = [], scalar_prefetch = 0 : i64, scratch_operands = 0 : i64, tpu.core_type = #tpu.core_type<tc>} {
    %c0 = arith.constant 0 : index
    %c0_0 = arith.constant 0 : index
    %0 = vector.load %arg0[%c0, %c0_0] : memref<8x4xf32, #tpu.memory_space<vmem>>, vector<8x4xf32>
    %c0_1 = arith.constant 0 : index
    %c0_2 = arith.constant 0 : index
    %1 = vector.load %arg1[%c0_1, %c0_2] : memref<8x4xf32, #tpu.memory_space<vmem>>, vector<8x4xf32>
    %cst = arith.constant dense<0xFF800000> : vector<8xf32>
    %2 = vector.multi_reduction <maximumf>, %0, %cst [1] : vector<8x4xf32> to vector<8xf32>
    %3 = vector.shape_cast %2 : vector<8xf32> to vector<8x1xf32>
    %4 = vector.broadcast %3 : vector<8x1xf32> to vector<8x4xf32>
    %5 = arith.subf %0, %4 : vector<8x4xf32>
    %cst_3 = arith.constant dense<0xFF800000> : vector<8xf32>
    %6 = vector.multi_reduction <maximumf>, %1, %cst_3 [1] : vector<8x4xf32> to vector<8xf32>
    %7 = vector.shape_cast %6 : vector<8xf32> to vector<8x1xf32>
    %8 = vector.broadcast %7 : vector<8x1xf32> to vector<8x4xf32>
    %9 = arith.subf %1, %8 : vector<8x4xf32>
    %10 = tpu.concatenate %5, %5, %5, %5, %5, %9, %9, %9, %9, %9 in 1 : vector<8x4xf32>, vector<8x4xf32>, vector<8x4xf32>, vector<8x4xf32>, vector<8x4xf32>, vector<8x4xf32>, vector<8x4xf32>, vector<8x4xf32>, vector<8x4xf32>, vector<8x4xf32> -> vector<8x40xf32>
    %c0_4 = arith.constant 0 : index
    %c0_5 = arith.constant 0 : index
    %11 = vector.load %arg3[%c0_4, %c0_5] : memref<1x40xf32, #tpu.memory_space<vmem>>, vector<1x40xf32>
    %12 = vector.broadcast %11 : vector<1x40xf32> to vector<8x40xf32>
    %13 = arith.mulf %10, %12 : vector<8x40xf32>
    %14 = math.exp %13 : vector<8x40xf32>
    %15 = tpu.iota {dimensions = array<i32: 1>} : vector<8x40xi32>
    %c1_i32 = arith.constant 1 : i32
    %16 = vector.broadcast %c1_i32 : i32 to vector<8x40xi32>
    %17 = arith.andi %15, %16 : vector<8x40xi32>
    %c0_i32 = arith.constant 0 : i32
    %18 = vector.broadcast %c0_i32 : i32 to vector<8x40xi32>
    %19 = arith.cmpi eq, %17, %18 : vector<8x40xi32>
    %20 = vector.extract_strided_slice %14 {offsets = [0, 1], sizes = [8, 39], strides = [1, 1]} : vector<8x40xf32> to vector<8x39xf32>
    %21 = vector.extract_strided_slice %14 {offsets = [0, 0], sizes = [8, 1], strides = [1, 1]} : vector<8x40xf32> to vector<8x1xf32>
    %22 = tpu.concatenate %20, %21 in 1 : vector<8x39xf32>, vector<8x1xf32> -> vector<8x40xf32>
    %23 = vector.extract_strided_slice %14 {offsets = [0, 39], sizes = [8, 1], strides = [1, 1]} : vector<8x40xf32> to vector<8x1xf32>
    %24 = vector.extract_strided_slice %14 {offsets = [0, 0], sizes = [8, 39], strides = [1, 1]} : vector<8x40xf32> to vector<8x39xf32>
    %25 = tpu.concatenate %23, %24 in 1 : vector<8x1xf32>, vector<8x39xf32> -> vector<8x40xf32>
    %26 = arith.select %19, %22, %25 : vector<8x40xi1>, vector<8x40xf32>
    %27 = arith.addf %14, %26 : vector<8x40xf32>
    %c3_i32 = arith.constant 3 : i32
    %28 = vector.broadcast %c3_i32 : i32 to vector<8x40xi32>
    %29 = arith.andi %15, %28 : vector<8x40xi32>
    %c2_i32 = arith.constant 2 : i32
    %30 = vector.broadcast %c2_i32 : i32 to vector<8x40xi32>
    %31 = arith.cmpi slt, %29, %30 : vector<8x40xi32>
    %32 = vector.extract_strided_slice %27 {offsets = [0, 2], sizes = [8, 38], strides = [1, 1]} : vector<8x40xf32> to vector<8x38xf32>
    %33 = vector.extract_strided_slice %27 {offsets = [0, 0], sizes = [8, 2], strides = [1, 1]} : vector<8x40xf32> to vector<8x2xf32>
    %34 = tpu.concatenate %32, %33 in 1 : vector<8x38xf32>, vector<8x2xf32> -> vector<8x40xf32>
    %35 = vector.extract_strided_slice %27 {offsets = [0, 38], sizes = [8, 2], strides = [1, 1]} : vector<8x40xf32> to vector<8x2xf32>
    %36 = vector.extract_strided_slice %27 {offsets = [0, 0], sizes = [8, 38], strides = [1, 1]} : vector<8x40xf32> to vector<8x38xf32>
    %37 = tpu.concatenate %35, %36 in 1 : vector<8x2xf32>, vector<8x38xf32> -> vector<8x40xf32>
    %38 = arith.select %31, %34, %37 : vector<8x40xi1>, vector<8x40xf32>
    %39 = arith.addf %27, %38 : vector<8x40xf32>
    %40 = arith.divf %14, %39 : vector<8x40xf32>
    %41 = math.log %39 : vector<8x40xf32>
    %42 = arith.subf %13, %41 : vector<8x40xf32>
    %43 = vector.extract_strided_slice %40 {offsets = [0, 0], sizes = [8, 20], strides = [1, 1]} : vector<8x40xf32> to vector<8x20xf32>
    %44 = vector.extract_strided_slice %40 {offsets = [0, 20], sizes = [8, 20], strides = [1, 1]} : vector<8x40xf32> to vector<8x20xf32>
    %45 = vector.extract_strided_slice %42 {offsets = [0, 0], sizes = [8, 20], strides = [1, 1]} : vector<8x40xf32> to vector<8x20xf32>
    %46 = vector.extract_strided_slice %42 {offsets = [0, 20], sizes = [8, 20], strides = [1, 1]} : vector<8x40xf32> to vector<8x20xf32>
    %c0_6 = arith.constant 0 : index
    %c0_7 = arith.constant 0 : index
    %47 = vector.load %arg2[%c0_6, %c0_7] : memref<8x20xf32, #tpu.memory_space<vmem>>, vector<8x20xf32>
    %48 = arith.mulf %47, %45 : vector<8x20xf32>
    %49 = vector.shape_cast %48 : vector<8x20xf32> to vector<1x8x20xf32>
    %cst_8 = arith.constant dense<0.000000e+00> : vector<1xf32>
    %50 = vector.multi_reduction <add>, %49, %cst_8 [1, 2] : vector<1x8x20xf32> to vector<1xf32>
    %51 = vector.shape_cast %50 : vector<1xf32> to vector<1x1x1xf32>
    %52 = vector.extract %51[0, 0, 0] : f32 from vector<1x1x1xf32>
    %cst_9 = arith.constant 0.000000e+00 : f32
    %53 = arith.subf %cst_9, %52 : f32
    %cst_10 = arith.constant 8.000000e+00 : f32
    %54 = arith.divf %53, %cst_10 : f32
    %c0_11 = arith.constant 0 : index
    %c0_12 = arith.constant 0 : index
    %55 = vector.load %arg4[%c0_11, %c0_12] : memref<1x20xf32, #tpu.memory_space<vmem>>, vector<1x20xf32>
    %56 = vector.broadcast %55 : vector<1x20xf32> to vector<8x20xf32>
    %57 = arith.mulf %56, %44 : vector<8x20xf32>
    %58 = arith.subf %46, %45 : vector<8x20xf32>
    %59 = arith.mulf %57, %58 : vector<8x20xf32>
    %60 = vector.shape_cast %59 : vector<8x20xf32> to vector<1x8x20xf32>
    %cst_13 = arith.constant dense<0.000000e+00> : vector<1xf32>
    %61 = vector.multi_reduction <add>, %60, %cst_13 [1, 2] : vector<1x8x20xf32> to vector<1xf32>
    %62 = vector.shape_cast %61 : vector<1xf32> to vector<1x1x1xf32>
    %63 = vector.extract %62[0, 0, 0] : f32 from vector<1x1x1xf32>
    %cst_14 = arith.constant 1.500000e+00 : f32
    %64 = arith.mulf %cst_14, %54 : f32
    %65 = arith.addf %63, %64 : f32
    %66 = arith.mulf %43, %43 : vector<8x20xf32>
    %67 = vector.shape_cast %66 : vector<8x20xf32> to vector<1x8x20xf32>
    %cst_15 = arith.constant dense<0.000000e+00> : vector<1xf32>
    %68 = vector.multi_reduction <add>, %67, %cst_15 [1, 2] : vector<1x8x20xf32> to vector<1xf32>
    %69 = vector.shape_cast %68 : vector<1xf32> to vector<1x1x1xf32>
    %70 = vector.extract %69[0, 0, 0] : f32 from vector<1x1x1xf32>
    %71 = arith.mulf %44, %44 : vector<8x20xf32>
    %72 = vector.shape_cast %71 : vector<8x20xf32> to vector<1x8x20xf32>
    %cst_16 = arith.constant dense<0.000000e+00> : vector<1xf32>
    %73 = vector.multi_reduction <add>, %72, %cst_16 [1, 2] : vector<1x8x20xf32> to vector<1xf32>
    %74 = vector.shape_cast %73 : vector<1xf32> to vector<1x1x1xf32>
    %75 = vector.extract %74[0, 0, 0] : f32 from vector<1x1x1xf32>
    %76 = arith.mulf %43, %44 : vector<8x20xf32>
    %77 = vector.shape_cast %76 : vector<8x20xf32> to vector<1x8x20xf32>
    %cst_17 = arith.constant dense<0.000000e+00> : vector<1xf32>
    %78 = vector.multi_reduction <add>, %77, %cst_17 [1, 2] : vector<1x8x20xf32> to vector<1xf32>
    %79 = vector.shape_cast %78 : vector<1xf32> to vector<1x1x1xf32>
    %80 = vector.extract %79[0, 0, 0] : f32 from vector<1x1x1xf32>
    %81 = arith.mulf %70, %70 : f32
    %cst_18 = arith.constant 2.000000e+00 : f32
    %82 = arith.mulf %cst_18, %80 : f32
    %83 = arith.mulf %82, %80 : f32
    %84 = arith.subf %81, %83 : f32
    %85 = arith.mulf %75, %75 : f32
    %86 = arith.addf %84, %85 : f32
    %cst_19 = arith.constant 2.500000e-04 : f32
    %87 = arith.mulf %cst_19, %86 : f32
    %c0_20 = arith.constant 0 : index
    %c0_21 = arith.constant 0 : index
    %88 = vector.load %arg5[%c0_20, %c0_21] : memref<8x160xf32, #tpu.memory_space<vmem>>, vector<8x160xf32>
    %c0_22 = arith.constant 0 : index
    %c0_23 = arith.constant 0 : index
    %89 = vector.load %arg6[%c0_22, %c0_23] : memref<160x20xf32, #tpu.memory_space<vmem>>, vector<160x20xf32>
    %90 = tpu.concatenate %43, %43, %43, %43, %43, %43, %43, %43 in 1 : vector<8x20xf32>, vector<8x20xf32>, vector<8x20xf32>, vector<8x20xf32>, vector<8x20xf32>, vector<8x20xf32>, vector<8x20xf32>, vector<8x20xf32> -> vector<8x160xf32>
    %91 = arith.mulf %90, %88 : vector<8x160xf32>
    %cst_24 = arith.constant dense<0.000000e+00> : vector<160xf32>
    %92 = vector.multi_reduction <add>, %91, %cst_24 [0] : vector<8x160xf32> to vector<160xf32>
    %93 = vector.shape_cast %92 : vector<160xf32> to vector<1x160xf32>
    %94 = tpu.concatenate %44, %44, %44, %44, %44, %44, %44, %44 in 1 : vector<8x20xf32>, vector<8x20xf32>, vector<8x20xf32>, vector<8x20xf32>, vector<8x20xf32>, vector<8x20xf32>, vector<8x20xf32>, vector<8x20xf32> -> vector<8x160xf32>
    %95 = arith.mulf %94, %88 : vector<8x160xf32>
    %cst_25 = arith.constant dense<0.000000e+00> : vector<160xf32>
    %96 = vector.multi_reduction <add>, %95, %cst_25 [0] : vector<8x160xf32> to vector<160xf32>
    %97 = vector.shape_cast %96 : vector<160xf32> to vector<1x160xf32>
    %98 = tpu.concatenate %43, %43, %43, %43, %43, %43, %43, %43, %43, %43, %43, %43, %43, %43, %43, %43 in 0 : vector<8x20xf32>, vector<8x20xf32>, vector<8x20xf32>, vector<8x20xf32>, vector<8x20xf32>, vector<8x20xf32>, vector<8x20xf32>, vector<8x20xf32>, vector<8x20xf32>, vector<8x20xf32>, vector<8x20xf32>, vector<8x20xf32>, vector<8x20xf32>, vector<8x20xf32>, vector<8x20xf32>, vector<8x20xf32> -> vector<128x20xf32>
    %99 = tpu.concatenate %43, %43, %43, %43 in 0 : vector<8x20xf32>, vector<8x20xf32>, vector<8x20xf32>, vector<8x20xf32> -> vector<32x20xf32>
    %100 = tpu.concatenate %98, %99 in 0 : vector<128x20xf32>, vector<32x20xf32> -> vector<160x20xf32>
    %101 = arith.mulf %100, %89 : vector<160x20xf32>
    %cst_26 = arith.constant dense<0.000000e+00> : vector<160xf32>
    %102 = vector.multi_reduction <add>, %101, %cst_26 [1] : vector<160x20xf32> to vector<160xf32>
    %103 = vector.shape_cast %102 : vector<160xf32> to vector<160x1xf32>
    %104 = tpu.concatenate %44, %44, %44, %44, %44, %44, %44, %44, %44, %44, %44, %44, %44, %44, %44, %44 in 0 : vector<8x20xf32>, vector<8x20xf32>, vector<8x20xf32>, vector<8x20xf32>, vector<8x20xf32>, vector<8x20xf32>, vector<8x20xf32>, vector<8x20xf32>, vector<8x20xf32>, vector<8x20xf32>, vector<8x20xf32>, vector<8x20xf32>, vector<8x20xf32>, vector<8x20xf32>, vector<8x20xf32>, vector<8x20xf32> -> vector<128x20xf32>
    %105 = tpu.concatenate %44, %44, %44, %44 in 0 : vector<8x20xf32>, vector<8x20xf32>, vector<8x20xf32>, vector<8x20xf32> -> vector<32x20xf32>
    %106 = tpu.concatenate %104, %105 in 0 : vector<128x20xf32>, vector<32x20xf32> -> vector<160x20xf32>
    %107 = arith.mulf %106, %89 : vector<160x20xf32>
    %cst_27 = arith.constant dense<0.000000e+00> : vector<160xf32>
    %108 = vector.multi_reduction <add>, %107, %cst_27 [1] : vector<160x20xf32> to vector<160xf32>
    %109 = vector.shape_cast %108 : vector<160xf32> to vector<160x1xf32>
    %110 = vector.broadcast %103 : vector<160x1xf32> to vector<160x160xf32>
    %111 = vector.broadcast %93 : vector<1x160xf32> to vector<160x160xf32>
    %112 = arith.mulf %110, %111 : vector<160x160xf32>
    %113 = vector.broadcast %109 : vector<160x1xf32> to vector<160x160xf32>
    %114 = vector.broadcast %97 : vector<1x160xf32> to vector<160x160xf32>
    %115 = arith.mulf %113, %114 : vector<160x160xf32>
    %116 = arith.subf %112, %115 : vector<160x160xf32>
    %117 = math.absf %116 : vector<160x160xf32>
    %118 = vector.shape_cast %117 : vector<160x160xf32> to vector<1x160x160xf32>
    %cst_28 = arith.constant dense<0.000000e+00> : vector<1xf32>
    %119 = vector.multi_reduction <add>, %118, %cst_28 [1, 2] : vector<1x160x160xf32> to vector<1xf32>
    %120 = vector.shape_cast %119 : vector<1xf32> to vector<1x1x1xf32>
    %121 = vector.extract %120[0, 0, 0] : f32 from vector<1x1x1xf32>
    %cst_29 = arith.constant 2.500000e-04 : f32
    %122 = arith.mulf %cst_29, %121 : f32
    %c0_30 = arith.constant 0 : index
    %c0_31 = arith.constant 0 : index
    %123 = vector.load %arg7[%c0_30, %c0_31] : memref<40x20xf32, #tpu.memory_space<vmem>>, vector<40x20xf32>
    %124 = tpu.concatenate %44, %44, %44, %44, %44 in 0 : vector<8x20xf32>, vector<8x20xf32>, vector<8x20xf32>, vector<8x20xf32>, vector<8x20xf32> -> vector<40x20xf32>
    %125 = arith.mulf %124, %123 : vector<40x20xf32>
    %126 = tpu.concatenate %43, %43, %43, %43, %43 in 0 : vector<8x20xf32>, vector<8x20xf32>, vector<8x20xf32>, vector<8x20xf32>, vector<8x20xf32> -> vector<40x20xf32>
    %127 = arith.mulf %126, %123 : vector<40x20xf32>
    %cst_32 = arith.constant dense<0.000000e+00> : vector<40x40xf32>
    %128 = tpu.matmul %125, %125, %cst_32 {dimension_numbers = #tpu.dot_dimension_numbers<[1], [1], [0], [0], [0, 0, 1, 0], [], []>} : vector<40x20xf32>, vector<40x20xf32>, vector<40x40xf32> -> vector<40x40xf32>
    %cst_33 = arith.constant dense<0.000000e+00> : vector<40x40xf32>
    %129 = tpu.matmul %127, %127, %cst_33 {dimension_numbers = #tpu.dot_dimension_numbers<[1], [1], [0], [0], [0, 0, 1, 0], [], []>} : vector<40x20xf32>, vector<40x20xf32>, vector<40x40xf32> -> vector<40x40xf32>
    %130 = arith.subf %128, %129 : vector<40x40xf32>
    %cst_34 = arith.constant dense<0.000000e+00> : vector<20x20xf32>
    %131 = tpu.matmul %125, %125, %cst_34 {dimension_numbers = #tpu.dot_dimension_numbers<[0], [0], [1], [1], [0, 1, 1, 1], [], []>} : vector<40x20xf32>, vector<40x20xf32>, vector<20x20xf32> -> vector<20x20xf32>
    %cst_35 = arith.constant dense<0.000000e+00> : vector<20x20xf32>
    %132 = tpu.matmul %127, %127, %cst_35 {dimension_numbers = #tpu.dot_dimension_numbers<[0], [0], [1], [1], [0, 1, 1, 1], [], []>} : vector<40x20xf32>, vector<40x20xf32>, vector<20x20xf32> -> vector<20x20xf32>
    %133 = arith.subf %131, %132 : vector<20x20xf32>
    %134 = arith.mulf %130, %130 : vector<40x40xf32>
    %135 = vector.shape_cast %134 : vector<40x40xf32> to vector<1x40x40xf32>
    %cst_36 = arith.constant dense<0.000000e+00> : vector<1xf32>
    %136 = vector.multi_reduction <add>, %135, %cst_36 [1, 2] : vector<1x40x40xf32> to vector<1xf32>
    %137 = vector.shape_cast %136 : vector<1xf32> to vector<1x1x1xf32>
    %138 = vector.extract %137[0, 0, 0] : f32 from vector<1x1x1xf32>
    %cst_37 = arith.constant 1.000000e+00 : f32
    %139 = arith.mulf %cst_37, %138 : f32
    %140 = arith.mulf %133, %133 : vector<20x20xf32>
    %141 = vector.shape_cast %140 : vector<20x20xf32> to vector<1x20x20xf32>
    %cst_38 = arith.constant dense<0.000000e+00> : vector<1xf32>
    %142 = vector.multi_reduction <add>, %141, %cst_38 [1, 2] : vector<1x20x20xf32> to vector<1xf32>
    %143 = vector.shape_cast %142 : vector<1xf32> to vector<1x1x1xf32>
    %144 = vector.extract %143[0, 0, 0] : f32 from vector<1x1x1xf32>
    %cst_39 = arith.constant 1.000000e+00 : f32
    %145 = arith.mulf %cst_39, %144 : f32
    %146 = arith.addf %139, %145 : f32
    %147 = arith.addf %65, %122 : f32
    %148 = arith.addf %147, %87 : f32
    %149 = arith.addf %148, %146 : f32
    %c0_40 = arith.constant 0 : index
    %c0_41 = arith.constant 0 : index
    %150 = memref.load %arg8[%c0_40, %c0_41] : memref<1x1xf32, #tpu.memory_space<smem>>
    memref.store %149, %arg8[%c0_40, %c0_41] : memref<1x1xf32, #tpu.memory_space<smem>>
    return
  }
}

</mosaic_0001>

<llo_original>
// kernel: tpu_custom_call.1
$region0: #{tpu_custom_call.1}
  #allocation0 [shape = 'u32[]', space=smem, size = 0x4, offset = 0x4, fixed_abs, tag = 'smem constant byte address 0x4 - core index']
  #allocation1 [shape = 'u32[144,128]{1,0:T(1,128)}', space=vmem, size = 0x12000, scoped, tag = 'internal scratch']
  %s0 = inlined_call_operand.vmem [shape: f32[8,4], index: 0, kind: input, shape index: {}]
  %s1 = inlined_call_operand.vmem [shape: f32[8,4], index: 1, kind: input, shape index: {}]
  %s2 = inlined_call_operand.vmem [shape: f32[8,20], index: 2, kind: input, shape index: {}]
  %s3 = inlined_call_operand.vmem [shape: f32[1,40], index: 3, kind: input, shape index: {}]
  %s4 = inlined_call_operand.vmem [shape: f32[1,20], index: 4, kind: input, shape index: {}]
  %s5 = inlined_call_operand.vmem [shape: f32[8,160], index: 5, kind: input, shape index: {}]
  %s6 = inlined_call_operand.vmem [shape: f32[160,20], index: 6, kind: input, shape index: {}]
  %s7 = inlined_call_operand.vmem [shape: f32[40,20], index: 7, kind: input, shape index: {}]
  %s8 = inlined_call_operand.hbm [shape: f32[1,1], index: 8, kind: output, shape index: {}]
  %s9 = sld [smem:[#allocation0]]
  $region42: #{tpu_custom_call.1} parent=0
    _
  %s11 = ssub.s32 1, %s9
  %s12 = scalar_select 0, %s11, %s9
  $region1: #{tpu_custom_call.1} parent=0
    #allocation2 [shape = 'u8[512]{0}', space=smem, size = 0x200, scoped, tag = 'output window, operand 0, single buffered']
    #allocation3 [shape = 's32[1]{0}', space=sflag, size = 0x4, scoped, tag = 'scoped memory for tpu_custom_call.1']
    %13 = vsyncpa [#allocation3], 0
    // Predicated region
    $region2: #{tpu_custom_call.1} parent=1 // pred_check
      _
    $region3: #{tpu_custom_call.1} parent=1 // pred_check_branch
      %15 = sbr.rel (0) target = $region5
    $region4: #{tpu_custom_call.1} parent=1 // pred_region
      _
    $region5: #{tpu_custom_call.1} parent=1 // pred_fallthru
      _
    // Predicated region
    $region6: #{tpu_custom_call.1} parent=1 // pred_check
      _
    $region7: #{tpu_custom_call.1} parent=1 // pred_check_branch
      %17 = sbr.rel (0) target = $region9
    $region8: #{tpu_custom_call.1} parent=1 // pred_region
      _
    $region9: #{tpu_custom_call.1} parent=1 // pred_fallthru
      _
    // Predicated region
    $region10: #{tpu_custom_call.1} parent=1 // pred_check
      _
    $region11: #{tpu_custom_call.1} parent=1 // pred_check_branch
      %19 = sbr.rel (0) target = $region13
    $region12: #{tpu_custom_call.1} parent=1 // pred_region
      _
    $region13: #{tpu_custom_call.1} parent=1 // pred_fallthru
      _
    // Predicated region
    $region14: #{tpu_custom_call.1} parent=1 // pred_check
      _
    $region15: #{tpu_custom_call.1} parent=1 // pred_check_branch
      %21 = sbr.rel (0) target = $region17
    $region16: #{tpu_custom_call.1} parent=1 // pred_region
      _
    $region17: #{tpu_custom_call.1} parent=1 // pred_fallthru
      _
    // Predicated region
    $region18: #{tpu_custom_call.1} parent=1 // pred_check
      _
    $region19: #{tpu_custom_call.1} parent=1 // pred_check_branch
      %23 = sbr.rel (0) target = $region21
    $region20: #{tpu_custom_call.1} parent=1 // pred_region
      _
    $region21: #{tpu_custom_call.1} parent=1 // pred_fallthru
      _
    // Predicated region
    $region22: #{tpu_custom_call.1} parent=1 // pred_check
      _
    $region23: #{tpu_custom_call.1} parent=1 // pred_check_branch
      %25 = sbr.rel (0) target = $region25
    $region24: #{tpu_custom_call.1} parent=1 // pred_region
      _
    $region25: #{tpu_custom_call.1} parent=1 // pred_fallthru
      _
    // Predicated region
    $region26: #{tpu_custom_call.1} parent=1 // pred_check
      _
    $region27: #{tpu_custom_call.1} parent=1 // pred_check_branch
      %27 = sbr.rel (0) target = $region29
    $region28: #{tpu_custom_call.1} parent=1 // pred_region
      _
    $region29: #{tpu_custom_call.1} parent=1 // pred_fallthru
      _
    // Predicated region
    $region30: #{tpu_custom_call.1} parent=1 // pred_check
      _
    $region31: #{tpu_custom_call.1} parent=1 // pred_check_branch
      %29 = sbr.rel (0) target = $region33
    $region32: #{tpu_custom_call.1} parent=1 // pred_region
      _
    $region33: #{tpu_custom_call.1} parent=1 // pred_fallthru
      _
    %v30 = vld [vmem:[%s0] sm:$0xff]
    %v31 = vld [vmem:[%s1] sm:$0xff]
    %vm32 = vcmask 31744
    %v33 = vsel %vm32, %v30, -inf
    %34 = vmax.xlane.f32.xlu0 %v33
    %v35 = vpop.xlane.xlu0 %34
    %v36 = vsub.f32 %v30, %v35
    %v37 = vsel %vm32, %v31, -inf
    %38 = vmax.xlane.f32.xlu0 %v37
    %v39 = vpop.xlane.xlu0 %38
    %v40 = vsub.f32 %v31, %v39
    %42 = vrot.lane.b32.xlu0 %v36, 4
    %v43 = vpop.permute.xlu0 %42
    %45 = vrot.lane.b32.xlu0 %v36, 8
    %v46 = vpop.permute.xlu0 %45
    %48 = vrot.lane.b32.xlu0 %v36, 12
    %v49 = vpop.permute.xlu0 %48
    %51 = vrot.lane.b32.xlu0 %v36, 16
    %v52 = vpop.permute.xlu0 %51
    %55 = vrot.lane.b32.xlu0 %v40, 20
    %v56 = vpop.permute.xlu0 %55
    %58 = vrot.lane.b32.xlu0 %v40, 24
    %v59 = vpop.permute.xlu0 %58
    %61 = vrot.lane.b32.xlu0 %v40, 28
    %v62 = vpop.permute.xlu0 %61
    %64 = vrot.lane.b32.xlu0 %v40, 32
    %v65 = vpop.permute.xlu0 %64
    %67 = vrot.lane.b32.xlu0 %v40, 36
    %v68 = vpop.permute.xlu0 %67
    %v70 = vsel %vm32, %v36, %v43
    %vm71 = vcmask 64512
    %v72 = vsel %vm71, %v70, %v46
    %vm73 = vcmask 97280
    %v74 = vsel %vm73, %v72, %v49
    %vm75 = vcmask 130048
    %v76 = vsel %vm75, %v74, %v52
    %vm77 = vcmask 162816
    %v78 = vsel %vm77, %v76, %v56
    %vm79 = vcmask 195584
    %v80 = vsel %vm79, %v78, %v59
    %vm81 = vcmask 228352
    %v82 = vsel %vm81, %v80, %v62
    %vm83 = vcmask 261120
    %v84 = vsel %vm83, %v82, %v65
    %vm85 = vcmask 293888
    %v86 = vsel %vm85, %v84, %v68
    %v87 = vld [vmem:[%s3] sm:$0x1]
    %v89 = vlaneseq
    %v90 = vshrl.u32 %v89, 7
    %v91 = vsub.s32 0, %v90
    %v92 = vrot.slane %v87, %v91
    %v94 = vmul.f32 %v86, %v92
    %v95 = vmul.f32 %v94, 1.442695
    %v96 = vpow.pop %v95
    %v97 = vlaneseq
    %v98 = vand.u32 %v97, 127
    %v99 = vand.u32 %v98, 1
    %vm100 = vcmp.eq.s32.totalorder %v99, 0
    %102 = vrot.lane.b32.xlu0 %v96, 127
    %v103 = vpop.permute.xlu0 %102
    %105 = vrot.lane.b32.xlu0 %v96, 39
    %v106 = vpop.permute.xlu0 %105
    %vm108 = vcmask 318464
    %v109 = vsel %vm108, %v103, %v106
    %110 = vrot.lane.b32.xlu0 %v96, 89
    %v111 = vpop.permute.xlu0 %110
    %113 = vrot.lane.b32.xlu0 %v96, 1
    %v114 = vpop.permute.xlu0 %113
    %vm116 = vcmask 7168
    %v117 = vsel %vm116, %v111, %v114
    %v118 = vsel %vm100, %v109, %v117
    %v119 = vadd.f32 %v96, %v118
    %v120 = vand.u32 %v98, 3
    %vm121 = vcmp.lt.s32.totalorder %v120, 2
    %123 = vrot.lane.b32.xlu0 %v119, 126
    %v124 = vpop.permute.xlu0 %123
    %126 = vrot.lane.b32.xlu0 %v119, 38
    %v127 = vpop.permute.xlu0 %126
    %vm129 = vcmask 310272
    %v130 = vsel %vm129, %v124, %v127
    %131 = vrot.lane.b32.xlu0 %v119, 90
    %v132 = vpop.permute.xlu0 %131
    %134 = vrot.lane.b32.xlu0 %v119, 2
    %v135 = vpop.permute.xlu0 %134
    %vm137 = vcmask 15360
    %v138 = vsel %vm137, %v132, %v135
    %v139 = vsel %vm121, %v130, %v138
    %v140 = vadd.f32 %v119, %v139
    %v141 = vrcp.pop %v140
    %v142 = vmul.f32 %v96, %v141
    %v143 = vlog2.pop %v140
    %v144 = vmul.f32 %v143, 0.6931472
    %v145 = vsub.f32 %v94, %v144
    %v146 = vld [vmem:[%s2] sm:$0xff]
    %v147 = vmul.f32 %v146, %v145
    %v148 = vsel %vm77, %v147, 0.0
    %149 = vadd.xlane.f32.xlu0 %v148
    %v150 = vpop.xlane.xlu0 %149
    %v151 = vrot.slane %v150, 4
    %v152 = vadd.f32 %v150, %v151
    %v153 = vrot.slane %v152, 2
    %v154 = vadd.f32 %v152, %v153
    %v155 = vrot.slane %v154, 1
    %v156 = vadd.f32 %v154, %v155
    %s157 = vtos %v156
    %s158 = ssub.f32 0.0, %s157
    %v159 = vrcp.pop 8.0
    %s160 = vtos %v159
    %s161 = smul.f32 %s158, %s160
    %v162 = vld [vmem:[%s4] sm:$0x1]
    %v164 = vlaneseq
    %v165 = vshrl.u32 %v164, 7
    %v166 = vsub.s32 0, %v165
    %v167 = vrot.slane %v162, %v166
    %170 = vrot.lane.b32.xlu0 %v142, 108
    %v171 = vpop.permute.xlu0 %170
    %v173 = vmul.f32 %v167, %v171
    %175 = vrot.lane.b32.xlu0 %v145, 20
    %v176 = vpop.permute.xlu0 %175
    %v178 = vsub.f32 %v145, %v176
    %180 = vrot.lane.b32.xlu0 %v178, 108
    %v181 = vpop.permute.xlu0 %180
    %v183 = vmul.f32 %v173, %v181
    %v184 = vsel %vm77, %v183, 0.0
    %185 = vadd.xlane.f32.xlu0 %v184
    %v186 = vpop.xlane.xlu0 %185
    %v187 = vrot.slane %v186, 4
    %v188 = vadd.f32 %v186, %v187
    %v189 = vrot.slane %v188, 2
    %v190 = vadd.f32 %v188, %v189
    %v191 = vrot.slane %v190, 1
    %v192 = vadd.f32 %v190, %v191
    %s193 = vtos %v192
    %s194 = smul.f32 %s161, 1.5
    %s195 = sadd.f32 %s193, %s194
    %v196 = vmul.f32 %v142, %v142
    %v197 = vsel %vm77, %v196, 0.0
    %198 = vadd.xlane.f32.xlu0 %v197
    %v199 = vpop.xlane.xlu0 %198
    %v200 = vrot.slane %v199, 4
    %v201 = vadd.f32 %v199, %v200
    %v202 = vrot.slane %v201, 2
    %v203 = vadd.f32 %v201, %v202
    %v204 = vrot.slane %v203, 1
    %v205 = vadd.f32 %v203, %v204
    %s206 = vtos %v205
    %208 = vrot.lane.b32.xlu0 %v196, 108
    %v209 = vpop.permute.xlu0 %208
    %v211 = vsel %vm77, %v209, 0.0
    %212 = vadd.xlane.f32.xlu0 %v211
    %v213 = vpop.xlane.xlu0 %212
    %v214 = vrot.slane %v213, 4
    %v215 = vadd.f32 %v213, %v214
    %v216 = vrot.slane %v215, 2
    %v217 = vadd.f32 %v215, %v216
    %v218 = vrot.slane %v217, 1
    %v219 = vadd.f32 %v217, %v218
    %s220 = vtos %v219
    %v221 = vmul.f32 %v142, %v171
    %v222 = vsel %vm77, %v221, 0.0
    %223 = vadd.xlane.f32.xlu0 %v222
    %v224 = vpop.xlane.xlu0 %223
    %v225 = vrot.slane %v224, 4
    %v226 = vadd.f32 %v224, %v225
    %v227 = vrot.slane %v226, 2
    %v228 = vadd.f32 %v226, %v227
    %v229 = vrot.slane %v228, 1
    %v230 = vadd.f32 %v228, %v229
    %s231 = vtos %v230
    %s232 = smul.f32 %s206, %s206
    %s233 = smul.f32 %s231, 2.0
    %s234 = smul.f32 %s233, %s231
    %s235 = ssub.f32 %s232, %s234
    %s236 = smul.f32 %s220, %s220
    %s237 = sadd.f32 %s235, %s236
    %s238 = smul.f32 %s237, 0.00025
    %v239 = vld [vmem:[%s5] sm:$0xff]
    %v240 = vld [vmem:[%s5 + $0x8] sm:$0xff]
    %v241 = vld [vmem:[%s6] sm:$0xff]
    %v242 = vld [vmem:[%s6 + $0x8] sm:$0xff]
    %v243 = vld [vmem:[%s6 + $0x10] sm:$0xff]
    %v244 = vld [vmem:[%s6 + $0x18] sm:$0xff]
    %v245 = vld [vmem:[%s6 + $0x20] sm:$0xff]
    %v246 = vld [vmem:[%s6 + $0x28] sm:$0xff]
    %v247 = vld [vmem:[%s6 + $0x30] sm:$0xff]
    %v248 = vld [vmem:[%s6 + $0x38] sm:$0xff]
    %v249 = vld [vmem:[%s6 + $0x40] sm:$0xff]
    %v250 = vld [vmem:[%s6 + $0x48] sm:$0xff]
    %v251 = vld [vmem:[%s6 + $0x50] sm:$0xff]
    %v252 = vld [vmem:[%s6 + $0x58] sm:$0xff]
    %v253 = vld [vmem:[%s6 + $0x60] sm:$0xff]
    %v254 = vld [vmem:[%s6 + $0x68] sm:$0xff]
    %v255 = vld [vmem:[%s6 + $0x70] sm:$0xff]
    %v256 = vld [vmem:[%s6 + $0x78] sm:$0xff]
    %v257 = vld [vmem:[%s6 + $0x80] sm:$0xff]
    %v258 = vld [vmem:[%s6 + $0x88] sm:$0xff]
    %v259 = vld [vmem:[%s6 + $0x90] sm:$0xff]
    %v260 = vld [vmem:[%s6 + $0x98] sm:$0xff]
    %261 = vrot.lane.b32.xlu0 %v142, 20
    %v262 = vpop.permute.xlu0 %261
    %264 = vrot.lane.b32.xlu0 %v142, 40
    %v265 = vpop.permute.xlu0 %264
    %267 = vrot.lane.b32.xlu0 %v142, 60
    %v268 = vpop.permute.xlu0 %267
    %270 = vrot.lane.b32.xlu0 %v142, 80
    %v271 = vpop.permute.xlu0 %270
    %273 = vrot.lane.b32.xlu0 %v142, 100
    %v274 = vpop.permute.xlu0 %273
    %276 = vrot.lane.b32.xlu0 %v142, 120
    %v277 = vpop.permute.xlu0 %276
    %279 = vrot.lane.b32.xlu0 %v142, 12
    %v280 = vpop.permute.xlu0 %279
    %v282 = vsel %vm77, %v142, %v262
    %vm283 = vcmask 326656
    %v284 = vsel %vm283, %v282, %v265
    %vm285 = vcmask 490496
    %v286 = vsel %vm285, %v284, %v268
    %vm287 = vcmask 654336
    %v288 = vsel %vm287, %v286, %v271
    %vm289 = vcmask 818176
    %v290 = vsel %vm289, %v288, %v274
    %vm291 = vcmask 982016
    %v292 = vsel %vm291, %v290, %v277
    %v293 = vsel %vm73, %v277, %v280
    %v294 = vmul.f32 %v292, %v239
    %v295 = vmul.f32 %v293, %v240
    %v296 = vrot.slane %v294, 4
    %v297 = vadd.f32 %v294, %v296
    %v298 = vrot.slane %v297, 2
    %v299 = vadd.f32 %v297, %v298
    %v300 = vrot.slane %v299, 1
    %v301 = vadd.f32 %v299, %v300
    %v302 = vsel %vm83, %v295, 0.0
    %v303 = vrot.slane %v302, 4
    %v304 = vadd.f32 %v302, %v303
    %v305 = vrot.slane %v304, 2
    %v306 = vadd.f32 %v304, %v305
    %v307 = vrot.slane %v306, 1
    %v308 = vadd.f32 %v306, %v307
    %v309 = vsel %vm77, %v171, %v142
    %v310 = vsel %vm283, %v309, %v262
    %v311 = vsel %vm285, %v310, %v265
    %v312 = vsel %vm287, %v311, %v268
    %v313 = vsel %vm289, %v312, %v271
    %v314 = vsel %vm291, %v313, %v274
    %v315 = vsel %vm73, %v274, %v277
    %v316 = vmul.f32 %v314, %v239
    %v317 = vmul.f32 %v315, %v240
    %v318 = vrot.slane %v316, 4
    %v319 = vadd.f32 %v316, %v318
    %v320 = vrot.slane %v319, 2
    %v321 = vadd.f32 %v319, %v320
    %v322 = vrot.slane %v321, 1
    %v323 = vadd.f32 %v321, %v322
    %v324 = vsel %vm83, %v317, 0.0
    %v325 = vrot.slane %v324, 4
    %v326 = vadd.f32 %v324, %v325
    %v327 = vrot.slane %v326, 2
    %v328 = vadd.f32 %v326, %v327
    %v329 = vrot.slane %v328, 1
    %v330 = vadd.f32 %v328, %v329
    %v331 = vmul.f32 %v142, %v241
    %v332 = vmul.f32 %v142, %v242
    %v333 = vmul.f32 %v142, %v243
    %v334 = vmul.f32 %v142, %v244
    %v335 = vmul.f32 %v142, %v245
    %v336 = vmul.f32 %v142, %v246
    %v337 = vmul.f32 %v142, %v247
    %v338 = vmul.f32 %v142, %v248
    %v339 = vmul.f32 %v142, %v249
    %v340 = vmul.f32 %v142, %v250
    %v341 = vmul.f32 %v142, %v251
    %v342 = vmul.f32 %v142, %v252
    %v343 = vmul.f32 %v142, %v253
    %v344 = vmul.f32 %v142, %v254
    %v345 = vmul.f32 %v142, %v255
    %v346 = vmul.f32 %v142, %v256
    %v347 = vmul.f32 %v142, %v257
    %v348 = vmul.f32 %v142, %v258
    %v349 = vmul.f32 %v142, %v259
    %v350 = vmul.f32 %v142, %v260
    %v351 = vsel %vm77, %v331, 0.0
    %352 = vadd.xlane.f32.xlu0 %v351
    %v353 = vpop.xlane.xlu0 %352
    %v354 = vsel %vm77, %v332, 0.0
    %355 = vadd.xlane.f32.xlu0 %v354
    %v356 = vpop.xlane.xlu0 %355
    %v357 = vsel %vm77, %v333, 0.0
    %358 = vadd.xlane.f32.xlu0 %v357
    %v359 = vpop.xlane.xlu0 %358
    %v360 = vsel %vm77, %v334, 0.0
    %361 = vadd.xlane.f32.xlu0 %v360
    %v362 = vpop.xlane.xlu0 %361
    %v363 = vsel %vm77, %v335, 0.0
    %364 = vadd.xlane.f32.xlu0 %v363
    %v365 = vpop.xlane.xlu0 %364
    %v366 = vsel %vm77, %v336, 0.0
    %367 = vadd.xlane.f32.xlu0 %v366
    %v368 = vpop.xlane.xlu0 %367
    %v369 = vsel %vm77, %v337, 0.0
    %370 = vadd.xlane.f32.xlu0 %v369
    %v371 = vpop.xlane.xlu0 %370
    %v372 = vsel %vm77, %v338, 0.0
    %373 = vadd.xlane.f32.xlu0 %v372
    %v374 = vpop.xlane.xlu0 %373
    %v375 = vsel %vm77, %v339, 0.0
    %376 = vadd.xlane.f32.xlu0 %v375
    %v377 = vpop.xlane.xlu0 %376
    %v378 = vsel %vm77, %v340, 0.0
    %379 = vadd.xlane.f32.xlu0 %v378
    %v380 = vpop.xlane.xlu0 %379
    %v381 = vsel %vm77, %v341, 0.0
    %382 = vadd.xlane.f32.xlu0 %v381
    %v383 = vpop.xlane.xlu0 %382
    %v384 = vsel %vm77, %v342, 0.0
    %385 = vadd.xlane.f32.xlu0 %v384
    %v386 = vpop.xlane.xlu0 %385
    %v387 = vsel %vm77, %v343, 0.0
    %388 = vadd.xlane.f32.xlu0 %v387
    %v389 = vpop.xlane.xlu0 %388
    %v390 = vsel %vm77, %v344, 0.0
    %391 = vadd.xlane.f32.xlu0 %v390
    %v392 = vpop.xlane.xlu0 %391
    %v393 = vsel %vm77, %v345, 0.0
    %394 = vadd.xlane.f32.xlu0 %v393
    %v395 = vpop.xlane.xlu0 %394
    %v396 = vsel %vm77, %v346, 0.0
    %397 = vadd.xlane.f32.xlu0 %v396
    %v398 = vpop.xlane.xlu0 %397
    %v399 = vsel %vm77, %v347, 0.0
    %400 = vadd.xlane.f32.xlu0 %v399
    %v401 = vpop.xlane.xlu0 %400
    %v402 = vsel %vm77, %v348, 0.0
    %403 = vadd.xlane.f32.xlu0 %v402
    %v404 = vpop.xlane.xlu0 %403
    %v405 = vsel %vm77, %v349, 0.0
    %406 = vadd.xlane.f32.xlu0 %v405
    %v407 = vpop.xlane.xlu0 %406
    %v408 = vsel %vm77, %v350, 0.0
    %409 = vadd.xlane.f32.xlu0 %v408
    %v410 = vpop.xlane.xlu0 %409
    %431 = vrot.lane.b32.xlu0 %v241, 20
    %v432 = vpop.permute.xlu0 %431
    %433 = vrot.lane.b32.xlu0 %v242, 20
    %v434 = vpop.permute.xlu0 %433
    %435 = vrot.lane.b32.xlu0 %v243, 20
    %v436 = vpop.permute.xlu0 %435
    %437 = vrot.lane.b32.xlu0 %v244, 20
    %v438 = vpop.permute.xlu0 %437
    %439 = vrot.lane.b32.xlu0 %v245, 20
    %v440 = vpop.permute.xlu0 %439
    %441 = vrot.lane.b32.xlu0 %v246, 20
    %v442 = vpop.permute.xlu0 %441
    %443 = vrot.lane.b32.xlu0 %v247, 20
    %v444 = vpop.permute.xlu0 %443
    %445 = vrot.lane.b32.xlu0 %v248, 20
    %v446 = vpop.permute.xlu0 %445
    %447 = vrot.lane.b32.xlu0 %v249, 20
    %v448 = vpop.permute.xlu0 %447
    %449 = vrot.lane.b32.xlu0 %v250, 20
    %v450 = vpop.permute.xlu0 %449
    %451 = vrot.lane.b32.xlu0 %v251, 20
    %v452 = vpop.permute.xlu0 %451
    %453 = vrot.lane.b32.xlu0 %v252, 20
    %v454 = vpop.permute.xlu0 %453
    %455 = vrot.lane.b32.xlu0 %v253, 20
    %v456 = vpop.permute.xlu0 %455
    %457 = vrot.lane.b32.xlu0 %v254, 20
    %v458 = vpop.permute.xlu0 %457
    %459 = vrot.lane.b32.xlu0 %v255, 20
    %v460 = vpop.permute.xlu0 %459
    %461 = vrot.lane.b32.xlu0 %v256, 20
    %v462 = vpop.permute.xlu0 %461
    %463 = vrot.lane.b32.xlu0 %v257, 20
    %v464 = vpop.permute.xlu0 %463
    %465 = vrot.lane.b32.xlu0 %v258, 20
    %v466 = vpop.permute.xlu0 %465
    %467 = vrot.lane.b32.xlu0 %v259, 20
    %v468 = vpop.permute.xlu0 %467
    %469 = vrot.lane.b32.xlu0 %v260, 20
    %v470 = vpop.permute.xlu0 %469
    %v491 = vmul.f32 %v142, %v432
    %v492 = vmul.f32 %v142, %v434
    %v493 = vmul.f32 %v142, %v436
    %v494 = vmul.f32 %v142, %v438
    %v495 = vmul.f32 %v142, %v440
    %v496 = vmul.f32 %v142, %v442
    %v497 = vmul.f32 %v142, %v444
    %v498 = vmul.f32 %v142, %v446
    %v499 = vmul.f32 %v142, %v448
    %v500 = vmul.f32 %v142, %v450
    %v501 = vmul.f32 %v142, %v452
    %v502 = vmul.f32 %v142, %v454
    %v503 = vmul.f32 %v142, %v456
    %v504 = vmul.f32 %v142, %v458
    %v505 = vmul.f32 %v142, %v460
    %v506 = vmul.f32 %v142, %v462
    %v507 = vmul.f32 %v142, %v464
    %v508 = vmul.f32 %v142, %v466
    %v509 = vmul.f32 %v142, %v468
    %v510 = vmul.f32 %v142, %v470
    %531 = vrot.lane.b32.xlu0 %v491, 108
    %v532 = vpop.permute.xlu0 %531
    %533 = vrot.lane.b32.xlu0 %v492, 108
    %v534 = vpop.permute.xlu0 %533
    %535 = vrot.lane.b32.xlu0 %v493, 108
    %v536 = vpop.permute.xlu0 %535
    %537 = vrot.lane.b32.xlu0 %v494, 108
    %v538 = vpop.permute.xlu0 %537
    %539 = vrot.lane.b32.xlu0 %v495, 108
    %v540 = vpop.permute.xlu0 %539
    %541 = vrot.lane.b32.xlu0 %v496, 108
    %v542 = vpop.permute.xlu0 %541
    %543 = vrot.lane.b32.xlu0 %v497, 108
    %v544 = vpop.permute.xlu0 %543
    %545 = vrot.lane.b32.xlu0 %v498, 108
    %v546 = vpop.permute.xlu0 %545
    %547 = vrot.lane.b32.xlu0 %v499, 108
    %v548 = vpop.permute.xlu0 %547
    %549 = vrot.lane.b32.xlu0 %v500, 108
    %v550 = vpop.permute.xlu0 %549
    %551 = vrot.lane.b32.xlu0 %v501, 108
    %v552 = vpop.permute.xlu0 %551
    %553 = vrot.lane.b32.xlu0 %v502, 108
    %v554 = vpop.permute.xlu0 %553
    %555 = vrot.lane.b32.xlu0 %v503, 108
    %v556 = vpop.permute.xlu0 %555
    %557 = vrot.lane.b32.xlu0 %v504, 108
    %v558 = vpop.permute.xlu0 %557
    %559 = vrot.lane.b32.xlu0 %v505, 108
    %v560 = vpop.permute.xlu0 %559
    %561 = vrot.lane.b32.xlu0 %v506, 108
    %v562 = vpop.permute.xlu0 %561
    %563 = vrot.lane.b32.xlu0 %v507, 108
    %v564 = vpop.permute.xlu0 %563
    %565 = vrot.lane.b32.xlu0 %v508, 108
    %v566 = vpop.permute.xlu0 %565
    %567 = vrot.lane.b32.xlu0 %v509, 108
    %v568 = vpop.permute.xlu0 %567
    %569 = vrot.lane.b32.xlu0 %v510, 108
    %v570 = vpop.permute.xlu0 %569
    %v591 = vsel %vm77, %v532, 0.0
    %592 = vadd.xlane.f32.xlu0 %v591
    %v593 = vpop.xlane.xlu0 %592
    %v594 = vsel %vm77, %v534, 0.0
    %595 = vadd.xlane.f32.xlu0 %v594
    %v596 = vpop.xlane.xlu0 %595
    %v597 = vsel %vm77, %v536, 0.0
    %598 = vadd.xlane.f32.xlu0 %v597
    %v599 = vpop.xlane.xlu0 %598
    %v600 = vsel %vm77, %v538, 0.0
    %601 = vadd.xlane.f32.xlu0 %v600
    %v602 = vpop.xlane.xlu0 %601
    %v603 = vsel %vm77, %v540, 0.0
    %604 = vadd.xlane.f32.xlu0 %v603
    %v605 = vpop.xlane.xlu0 %604
    %v606 = vsel %vm77, %v542, 0.0
    %607 = vadd.xlane.f32.xlu0 %v606
    %v608 = vpop.xlane.xlu0 %607
    %v609 = vsel %vm77, %v544, 0.0
    %610 = vadd.xlane.f32.xlu0 %v609
    %v611 = vpop.xlane.xlu0 %610
    %v612 = vsel %vm77, %v546, 0.0
    %613 = vadd.xlane.f32.xlu0 %v612
    %v614 = vpop.xlane.xlu0 %613
    %v615 = vsel %vm77, %v548, 0.0
    %616 = vadd.xlane.f32.xlu0 %v615
    %v617 = vpop.xlane.xlu0 %616
    %v618 = vsel %vm77, %v550, 0.0
    %619 = vadd.xlane.f32.xlu0 %v618
    %v620 = vpop.xlane.xlu0 %619
    %v621 = vsel %vm77, %v552, 0.0
    %622 = vadd.xlane.f32.xlu0 %v621
    %v623 = vpop.xlane.xlu0 %622
    %v624 = vsel %vm77, %v554, 0.0
    %625 = vadd.xlane.f32.xlu0 %v624
    %v626 = vpop.xlane.xlu0 %625
    %v627 = vsel %vm77, %v556, 0.0
    %628 = vadd.xlane.f32.xlu0 %v627
    %v629 = vpop.xlane.xlu0 %628
    %v630 = vsel %vm77, %v558, 0.0
    %631 = vadd.xlane.f32.xlu0 %v630
    %v632 = vpop.xlane.xlu0 %631
    %v633 = vsel %vm77, %v560, 0.0
    %634 = vadd.xlane.f32.xlu0 %v633
    %v635 = vpop.xlane.xlu0 %634
    %v636 = vsel %vm77, %v562, 0.0
    %637 = vadd.xlane.f32.xlu0 %v636
    %v638 = vpop.xlane.xlu0 %637
    %v639 = vsel %vm77, %v564, 0.0
    %640 = vadd.xlane.f32.xlu0 %v639
    %v641 = vpop.xlane.xlu0 %640
    %v642 = vsel %vm77, %v566, 0.0
    %643 = vadd.xlane.f32.xlu0 %v642
    %v644 = vpop.xlane.xlu0 %643
    %v645 = vsel %vm77, %v568, 0.0
    %646 = vadd.xlane.f32.xlu0 %v645
    %v647 = vpop.xlane.xlu0 %646
    %v648 = vsel %vm77, %v570, 0.0
    %649 = vadd.xlane.f32.xlu0 %v648
    %v650 = vpop.xlane.xlu0 %649
    %v651 = vmul.f32 %v353, %v301
    %v652 = vmul.f32 %v353, %v308
    %v653 = vmul.f32 %v356, %v301
    %v654 = vmul.f32 %v356, %v308
    %v655 = vmul.f32 %v359, %v301
    %v656 = vmul.f32 %v359, %v308
    %v657 = vmul.f32 %v362, %v301
    %v658 = vmul.f32 %v362, %v308
    %v659 = vmul.f32 %v365, %v301
    %v660 = vmul.f32 %v365, %v308
    %v661 = vmul.f32 %v368, %v301
    %v662 = vmul.f32 %v368, %v308
    %v663 = vmul.f32 %v371, %v301
    %v664 = vmul.f32 %v371, %v308
    %v665 = vmul.f32 %v374, %v301
    %v666 = vmul.f32 %v374, %v308
    %v667 = vmul.f32 %v377, %v301
    %v668 = vmul.f32 %v377, %v308
    %v669 = vmul.f32 %v380, %v301
    %v670 = vmul.f32 %v380, %v308
    %v671 = vmul.f32 %v383, %v301
    %v672 = vmul.f32 %v383, %v308
    %v673 = vmul.f32 %v386, %v301
    %v674 = vmul.f32 %v386, %v308
    %v675 = vmul.f32 %v389, %v301
    %v676 = vmul.f32 %v389, %v308
    %v677 = vmul.f32 %v392, %v301
    %v678 = vmul.f32 %v392, %v308
    %v679 = vmul.f32 %v395, %v301
    %v680 = vmul.f32 %v395, %v308
    %v681 = vmul.f32 %v398, %v301
    %v682 = vmul.f32 %v398, %v308
    %v683 = vmul.f32 %v401, %v301
    %v684 = vmul.f32 %v401, %v308
    %v685 = vmul.f32 %v404, %v301
    %v686 = vmul.f32 %v404, %v308
    %v687 = vmul.f32 %v407, %v301
    %v688 = vmul.f32 %v407, %v308
    %v689 = vmul.f32 %v410, %v301
    %v690 = vmul.f32 %v410, %v308
    %v691 = vmul.f32 %v593, %v323
    %v692 = vmul.f32 %v593, %v330
    %v693 = vmul.f32 %v596, %v323
    %v694 = vmul.f32 %v596, %v330
    %v695 = vmul.f32 %v599, %v323
    %v696 = vmul.f32 %v599, %v330
    %v697 = vmul.f32 %v602, %v323
    %v698 = vmul.f32 %v602, %v330
    %v699 = vmul.f32 %v605, %v323
    %v700 = vmul.f32 %v605, %v330
    %v701 = vmul.f32 %v608, %v323
    %v702 = vmul.f32 %v608, %v330
    %v703 = vmul.f32 %v611, %v323
    %v704 = vmul.f32 %v611, %v330
    %v705 = vmul.f32 %v614, %v323
    %v706 = vmul.f32 %v614, %v330
    %v707 = vmul.f32 %v617, %v323
    %v708 = vmul.f32 %v617, %v330
    %v709 = vmul.f32 %v620, %v323
    %v710 = vmul.f32 %v620, %v330
    %v711 = vmul.f32 %v623, %v323
    %v712 = vmul.f32 %v623, %v330
    %v713 = vmul.f32 %v626, %v323
    %v714 = vmul.f32 %v626, %v330
    %v715 = vmul.f32 %v629, %v323
    %v716 = vmul.f32 %v629, %v330
    %v717 = vmul.f32 %v632, %v323
    %v718 = vmul.f32 %v632, %v330
    %v719 = vmul.f32 %v635, %v323
    %v720 = vmul.f32 %v635, %v330
    %v721 = vmul.f32 %v638, %v323
    %v722 = vmul.f32 %v638, %v330
    %v723 = vmul.f32 %v641, %v323
    %v724 = vmul.f32 %v641, %v330
    %v725 = vmul.f32 %v644, %v323
    %v726 = vmul.f32 %v644, %v330
    %v727 = vmul.f32 %v647, %v323
    %v728 = vmul.f32 %v647, %v330
    %v729 = vmul.f32 %v650, %v323
    %v730 = vmul.f32 %v650, %v330
    %v731 = vsub.f32 %v651, %v691
    %v732 = vsub.f32 %v652, %v692
    %v733 = vsub.f32 %v653, %v693
    %v734 = vsub.f32 %v654, %v694
    %v735 = vsub.f32 %v655, %v695
    %v736 = vsub.f32 %v656, %v696
    %v737 = vsub.f32 %v657, %v697
    %v738 = vsub.f32 %v658, %v698
    %v739 = vsub.f32 %v659, %v699
    %v740 = vsub.f32 %v660, %v700
    %v741 = vsub.f32 %v661, %v701
    %v742 = vsub.f32 %v662, %v702
    %v743 = vsub.f32 %v663, %v703
    %v744 = vsub.f32 %v664, %v704
    %v745 = vsub.f32 %v665, %v705
    %v746 = vsub.f32 %v666, %v706
    %v747 = vsub.f32 %v667, %v707
    %v748 = vsub.f32 %v668, %v708
    %v749 = vsub.f32 %v669, %v709
    %v750 = vsub.f32 %v670, %v710
    %v751 = vsub.f32 %v671, %v711
    %v752 = vsub.f32 %v672, %v712
    %v753 = vsub.f32 %v673, %v713
    %v754 = vsub.f32 %v674, %v714
    %v755 = vsub.f32 %v675, %v715
    %v756 = vsub.f32 %v676, %v716
    %v757 = vsub.f32 %v677, %v717
    %v758 = vsub.f32 %v678, %v718
    %v759 = vsub.f32 %v679, %v719
    %v760 = vsub.f32 %v680, %v720
    %v761 = vsub.f32 %v681, %v721
    %v762 = vsub.f32 %v682, %v722
    %v763 = vsub.f32 %v683, %v723
    %v764 = vsub.f32 %v684, %v724
    %v765 = vsub.f32 %v685, %v725
    %v766 = vsub.f32 %v686, %v726
    %v767 = vsub.f32 %v687, %v727
    %v768 = vsub.f32 %v688, %v728
    %v769 = vsub.f32 %v689, %v729
    %v770 = vsub.f32 %v690, %v730
    %v771 = vand.u32 2147483647, %v731
    %v772 = vand.u32 2147483647, %v732
    %v773 = vand.u32 2147483647, %v733
    %v774 = vand.u32 2147483647, %v734
    %v775 = vand.u32 2147483647, %v735
    %v776 = vand.u32 2147483647, %v736
    %v777 = vand.u32 2147483647, %v737
    %v778 = vand.u32 2147483647, %v738
    %v779 = vand.u32 2147483647, %v739
    %v780 = vand.u32 2147483647, %v740
    %v781 = vand.u32 2147483647, %v741
    %v782 = vand.u32 2147483647, %v742
    %v783 = vand.u32 2147483647, %v743
    %v784 = vand.u32 2147483647, %v744
    %v785 = vand.u32 2147483647, %v745
    %v786 = vand.u32 2147483647, %v746
    %v787 = vand.u32 2147483647, %v747
    %v788 = vand.u32 2147483647, %v748
    %v789 = vand.u32 2147483647, %v749
    %v790 = vand.u32 2147483647, %v750
    %v791 = vand.u32 2147483647, %v751
    %v792 = vand.u32 2147483647, %v752
    %v793 = vand.u32 2147483647, %v753
    %v794 = vand.u32 2147483647, %v754
    %v795 = vand.u32 2147483647, %v755
    %v796 = vand.u32 2147483647, %v756
    %v797 = vand.u32 2147483647, %v757
    %v798 = vand.u32 2147483647, %v758
    %v799 = vand.u32 2147483647, %v759
    %v800 = vand.u32 2147483647, %v760
    %v801 = vand.u32 2147483647, %v761
    %v802 = vand.u32 2147483647, %v762
    %v803 = vand.u32 2147483647, %v763
    %v804 = vand.u32 2147483647, %v764
    %v805 = vand.u32 2147483647, %v765
    %v806 = vand.u32 2147483647, %v766
    %v807 = vand.u32 2147483647, %v767
    %v808 = vand.u32 2147483647, %v768
    %v809 = vand.u32 2147483647, %v769
    %v810 = vand.u32 2147483647, %v770
    %v811 = vsel %vm83, %v772, 0.0
    %v812 = vadd.f32 %v771, %v811
    %v813 = vadd.f32 %v812, %v773
    %v814 = vsel %vm83, %v774, 0.0
    %v815 = vadd.f32 %v813, %v814
    %v816 = vadd.f32 %v815, %v775
    %v817 = vsel %vm83, %v776, 0.0
    %v818 = vadd.f32 %v816, %v817
    %v819 = vadd.f32 %v818, %v777
    %v820 = vsel %vm83, %v778, 0.0
    %v821 = vadd.f32 %v819, %v820
    %v822 = vadd.f32 %v821, %v779
    %v823 = vsel %vm83, %v780, 0.0
    %v824 = vadd.f32 %v822, %v823
    %v825 = vadd.f32 %v824, %v781
    %v826 = vsel %vm83, %v782, 0.0
    %v827 = vadd.f32 %v825, %v826
    %v828 = vadd.f32 %v827, %v783
    %v829 = vsel %vm83, %v784, 0.0
    %v830 = vadd.f32 %v828, %v829
    %v831 = vadd.f32 %v830, %v785
    %v832 = vsel %vm83, %v786, 0.0
    %v833 = vadd.f32 %v831, %v832
    %v834 = vadd.f32 %v833, %v787
    %v835 = vsel %vm83, %v788, 0.0
    %v836 = vadd.f32 %v834, %v835
    %v837 = vadd.f32 %v836, %v789
    %v838 = vsel %vm83, %v790, 0.0
    %v839 = vadd.f32 %v837, %v838
    %v840 = vadd.f32 %v839, %v791
    %v841 = vsel %vm83, %v792, 0.0
    %v842 = vadd.f32 %v840, %v841
    %v843 = vadd.f32 %v842, %v793
    %v844 = vsel %vm83, %v794, 0.0
    %v845 = vadd.f32 %v843, %v844
    %v846 = vadd.f32 %v845, %v795
    %v847 = vsel %vm83, %v796, 0.0
    %v848 = vadd.f32 %v846, %v847
    %v849 = vadd.f32 %v848, %v797
    %v850 = vsel %vm83, %v798, 0.0
    %v851 = vadd.f32 %v849, %v850
    %v852 = vadd.f32 %v851, %v799
    %v853 = vsel %vm83, %v800, 0.0
    %v854 = vadd.f32 %v852, %v853
    %v855 = vadd.f32 %v854, %v801
    %v856 = vsel %vm83, %v802, 0.0
    %v857 = vadd.f32 %v855, %v856
    %v858 = vadd.f32 %v857, %v803
    %v859 = vsel %vm83, %v804, 0.0
    %v860 = vadd.f32 %v858, %v859
    %v861 = vadd.f32 %v860, %v805
    %v862 = vsel %vm83, %v806, 0.0
    %v863 = vadd.f32 %v861, %v862
    %v864 = vadd.f32 %v863, %v807
    %v865 = vsel %vm83, %v808, 0.0
    %v866 = vadd.f32 %v864, %v865
    %v867 = vadd.f32 %v866, %v809
    %v868 = vsel %vm83, %v810, 0.0
    %v869 = vadd.f32 %v867, %v868
    %870 = vadd.xlane.f32.xlu0 %v869
    %v871 = vpop.xlane.xlu0 %870
    %v872 = vrot.slane %v871, 4
    %v873 = vadd.f32 %v871, %v872
    %v874 = vrot.slane %v873, 2
    %v875 = vadd.f32 %v873, %v874
    %v876 = vrot.slane %v875, 1
    %v877 = vadd.f32 %v875, %v876
    %s878 = vtos %v877
    %s879 = smul.f32 %s878, 0.00025
    %v880 = vld [vmem:[%s7] sm:$0xff]
    %v881 = vld [vmem:[%s7 + $0x8] sm:$0xff]
    %v882 = vld [vmem:[%s7 + $0x10] sm:$0xff]
    %v883 = vld [vmem:[%s7 + $0x18] sm:$0xff]
    %v884 = vld [vmem:[%s7 + $0x20] sm:$0xff]
    %890 = vrot.lane.b32.xlu0 %v880, 20
    %v891 = vpop.permute.xlu0 %890
    %892 = vrot.lane.b32.xlu0 %v881, 20
    %v893 = vpop.permute.xlu0 %892
    %894 = vrot.lane.b32.xlu0 %v882, 20
    %v895 = vpop.permute.xlu0 %894
    %896 = vrot.lane.b32.xlu0 %v883, 20
    %v897 = vpop.permute.xlu0 %896
    %898 = vrot.lane.b32.xlu0 %v884, 20
    %v899 = vpop.permute.xlu0 %898
    %v905 = vmul.f32 %v142, %v891
    %v906 = vmul.f32 %v142, %v893
    %v907 = vmul.f32 %v142, %v895
    %v908 = vmul.f32 %v142, %v897
    %v909 = vmul.f32 %v142, %v899
    %v910 = vmul.f32 %v142, %v880
    %v911 = vmul.f32 %v142, %v881
    %v912 = vmul.f32 %v142, %v882
    %v913 = vmul.f32 %v142, %v883
    %v914 = vmul.f32 %v142, %v884
    %920 = vrot.lane.b32.xlu0 %v905, 108
    %v921 = vpop.permute.xlu0 %920
    %922 = vrot.lane.b32.xlu0 %v906, 108
    %v923 = vpop.permute.xlu0 %922
    %924 = vrot.lane.b32.xlu0 %v907, 108
    %v925 = vpop.permute.xlu0 %924
    %926 = vrot.lane.b32.xlu0 %v908, 108
    %v927 = vpop.permute.xlu0 %926
    %928 = vrot.lane.b32.xlu0 %v909, 108
    %v929 = vpop.permute.xlu0 %928
    %v930 = vsel %vm77, %v921, 0
    %v932 = vsel %vm77, %v923, 0
    %v934 = vsel %vm77, %v925, 0
    %v936 = vsel %vm77, %v927, 0
    %v938 = vsel %vm77, %v929, 0
    %940 = vmatprep.subr.mxu0 0.0
    %941 = vmatpush1.xpose.msra.mxu0 %v930
    %942 = vmatprep.subr.mxu0 0.0
    %943 = vmatpush1.xpose.msra.mxu0 %v932
    %944 = vmatprep.subr.mxu0 0.0
    %945 = vmatpush1.xpose.msra.mxu0 %v934
    %946 = vmatprep.subr.mxu0 0.0
    %947 = vmatpush1.xpose.msra.mxu0 %v936
    %948 = vmatprep.subr.mxu0 0.0
    %949 = vmatpush1.xpose.msra.mxu0 %v938
    %950 = vmatprep.subr.mxu0 0.0
    %951 = vmatpush1.xpose.msra.mxu0 0.0
    %952 = vmatprep.subr.mxu0 0.0
    %953 = vmatpush1.xpose.msra.mxu0 0.0
    %954 = vmatprep.subr.mxu0 0.0
    %955 = vmatpush1.xpose.msra.mxu0 0.0
    %956 = vmatprep.subr.mxu0 0.0
    %957 = vmatpush1.xpose.msra.mxu0 0.0
    %958 = vmatprep.subr.mxu0 0.0
    %959 = vmatpush1.xpose.msra.mxu0 0.0
    %960 = vmatprep.subr.mxu0 0.0
    %961 = vmatpush1.xpose.msra.mxu0 0.0
    %962 = vmatprep.subr.mxu0 0.0
    %963 = vmatpush1.xpose.msra.mxu0 0.0
    %964 = vmatprep.subr.mxu0 0.0
    %965 = vmatpush1.xpose.msra.mxu0 0.0
    %966 = vmatprep.subr.mxu0 0.0
    %967 = vmatpush1.xpose.msra.mxu0 0.0
    %968 = vmatprep.subr.mxu0 0.0
    %969 = vmatpush1.xpose.msra.mxu0 0.0
    %970 = vmatprep.subr.mxu0 0.0
    %971 = vmatpush1.xpose.msra.mxu0 0.0
    %972 = vmatprep.subr.mxu0 0.0
    %973 = vmatpush1.xpose.msra.mxu0 0.0
    %974 = vmatprep.subr.mxu0 0.0
    %975 = vmatpush1.xpose.msra.mxu0 0.0
    %976 = vmatprep.subr.mxu0 0.0
    %977 = vmatpush1.xpose.msra.mxu0 0.0
    %978 = vmatprep.subr.mxu0 0.0
    %979 = vmatpush1.xpose.msra.mxu0 0.0
    %980 = vmatprep.subr.mxu0 0.0
    %981 = vmatpush1.xpose.msra.mxu0 0.0
    %982 = vmatprep.subr.mxu0 0.0
    %983 = vmatpush1.xpose.msra.mxu0 0.0
    %984 = vmatprep.subr.mxu0 0.0
    %985 = vmatpush1.xpose.msra.mxu0 0.0
    %986 = vmatprep.subr.mxu0 0.0
    %987 = vmatpush1.xpose.msra.mxu0 0.0
    %988 = vmatprep.subr.mxu0 0.0
    %989 = vmatpush1.xpose.msra.mxu0 0.0
    %990 = vmatprep.subr.mxu0 0.0
    %991 = vmatpush1.xpose.msra.mxu0 0.0
    %992 = vmatprep.subr.mxu0 0.0
    %993 = vmatpush1.xpose.msra.mxu0 0.0
    %994 = vmatprep.subr.mxu0 0.0
    %995 = vmatpush1.xpose.msra.mxu0 0.0
    %996 = vmatprep.subr.mxu0 0.0
    %997 = vmatpush1.xpose.msra.mxu0 0.0
    %998 = vmatprep.subr.mxu0 0.0
    %999 = vmatpush1.xpose.msra.mxu0 0.0
    %1000 = vmatprep.subr.mxu0 0.0
    %1001 = vmatpush1.xpose.msra.mxu0 0.0
    %1002 = vmatprep.subr.mxu0 0.0
    %1003 = vmatpush1.xpose.msra.mxu0 0.0
    %1004 = vmatprep.mubr.f32.mxu0 0.0
    %1005 = vmatmul.mubr.f32.gmra.mrb[0].mxu0 %v930
    %v1006 = vpop.f32.mrb[0].mxu0
    %v1007 = vadd.f32 0.0, %v1006
    %v1008 = vpop.f32.mrb[0].mxu0
    %1009 = vmatprep.mubr.f32.mxu0 0.0
    %1010 = vmatmul.mubr.f32.gmra.mrb[0].mxu0 %v932
    %v1011 = vpop.f32.mrb[0].mxu0
    %v1012 = vadd.f32 0.0, %v1011
    %v1013 = vpop.f32.mrb[0].mxu0
    %1014 = vmatprep.mubr.f32.mxu0 0.0
    %1015 = vmatmul.mubr.f32.gmra.mrb[0].mxu0 %v934
    %v1016 = vpop.f32.mrb[0].mxu0
    %v1017 = vadd.f32 0.0, %v1016
    %v1018 = vpop.f32.mrb[0].mxu0
    %1019 = vmatprep.mubr.f32.mxu0 0.0
    %1020 = vmatmul.mubr.f32.gmra.mrb[0].mxu0 %v936
    %v1021 = vpop.f32.mrb[0].mxu0
    %v1022 = vadd.f32 0.0, %v1021
    %v1023 = vpop.f32.mrb[0].mxu0
    %1024 = vmatprep.mubr.f32.mxu0 0.0
    %1025 = vmatmul.mubr.f32.gmra.mrb[0].mxu0 %v938
    %v1026 = vpop.f32.mrb[0].mxu0
    %v1027 = vadd.f32 0.0, %v1026
    %v1028 = vpop.f32.mrb[0].mxu0
    %1029 = vdwg.mxu0
    %v1031 = vsel %vm77, %v910, 0
    %v1034 = vsel %vm77, %v911, 0
    %v1037 = vsel %vm77, %v912, 0
    %v1040 = vsel %vm77, %v913, 0
    %v1043 = vsel %vm77, %v914, 0
    %1045 = vmatprep.subr.mxu0 0.0
    %1046 = vmatpush1.xpose.msra.mxu0 %v1031
    %1047 = vmatprep.subr.mxu0 0.0
    %1048 = vmatpush1.xpose.msra.mxu0 %v1034
    %1049 = vmatprep.subr.mxu0 0.0
    %1050 = vmatpush1.xpose.msra.mxu0 %v1037
    %1051 = vmatprep.subr.mxu0 0.0
    %1052 = vmatpush1.xpose.msra.mxu0 %v1040
    %1053 = vmatprep.subr.mxu0 0.0
    %1054 = vmatpush1.xpose.msra.mxu0 %v1043
    %1055 = vmatprep.subr.mxu0 0.0
    %1056 = vmatpush1.xpose.msra.mxu0 0.0
    %1057 = vmatprep.subr.mxu0 0.0
    %1058 = vmatpush1.xpose.msra.mxu0 0.0
    %1059 = vmatprep.subr.mxu0 0.0
    %1060 = vmatpush1.xpose.msra.mxu0 0.0
    %1061 = vmatprep.subr.mxu0 0.0
    %1062 = vmatpush1.xpose.msra.mxu0 0.0
    %1063 = vmatprep.subr.mxu0 0.0
    %1064 = vmatpush1.xpose.msra.mxu0 0.0
    %1065 = vmatprep.subr.mxu0 0.0
    %1066 = vmatpush1.xpose.msra.mxu0 0.0
    %1067 = vmatprep.subr.mxu0 0.0
    %1068 = vmatpush1.xpose.msra.mxu0 0.0
    %1069 = vmatprep.subr.mxu0 0.0
    %1070 = vmatpush1.xpose.msra.mxu0 0.0
    %1071 = vmatprep.subr.mxu0 0.0
    %1072 = vmatpush1.xpose.msra.mxu0 0.0
    %1073 = vmatprep.subr.mxu0 0.0
    %1074 = vmatpush1.xpose.msra.mxu0 0.0
    %1075 = vmatprep.subr.mxu0 0.0
    %1076 = vmatpush1.xpose.msra.mxu0 0.0
    %1077 = vmatprep.subr.mxu0 0.0
    %1078 = vmatpush1.xpose.msra.mxu0 0.0
    %1079 = vmatprep.subr.mxu0 0.0
    %1080 = vmatpush1.xpose.msra.mxu0 0.0
    %1081 = vmatprep.subr.mxu0 0.0
    %1082 = vmatpush1.xpose.msra.mxu0 0.0
    %1083 = vmatprep.subr.mxu0 0.0
    %1084 = vmatpush1.xpose.msra.mxu0 0.0
    %1085 = vmatprep.subr.mxu0 0.0
    %1086 = vmatpush1.xpose.msra.mxu0 0.0
    %1087 = vmatprep.subr.mxu0 0.0
    %1088 = vmatpush1.xpose.msra.mxu0 0.0
    %1089 = vmatprep.subr.mxu0 0.0
    %1090 = vmatpush1.xpose.msra.mxu0 0.0
    %1091 = vmatprep.subr.mxu0 0.0
    %1092 = vmatpush1.xpose.msra.mxu0 0.0
    %1093 = vmatprep.subr.mxu0 0.0
    %1094 = vmatpush1.xpose.msra.mxu0 0.0
    %1095 = vmatprep.subr.mxu0 0.0
    %1096 = vmatpush1.xpose.msra.mxu0 0.0
    %1097 = vmatprep.subr.mxu0 0.0
    %1098 = vmatpush1.xpose.msra.mxu0 0.0
    %1099 = vmatprep.subr.mxu0 0.0
    %1100 = vmatpush1.xpose.msra.mxu0 0.0
    %1101 = vmatprep.subr.mxu0 0.0
    %1102 = vmatpush1.xpose.msra.mxu0 0.0
    %1103 = vmatprep.subr.mxu0 0.0
    %1104 = vmatpush1.xpose.msra.mxu0 0.0
    %1105 = vmatprep.subr.mxu0 0.0
    %1106 = vmatpush1.xpose.msra.mxu0 0.0
    %1107 = vmatprep.subr.mxu0 0.0
    %1108 = vmatpush1.xpose.msra.mxu0 0.0
    %1109 = vmatprep.mubr.f32.mxu0 0.0
    %1110 = vmatmul.mubr.f32.gmra.mrb[0].mxu0 %v1031
    %v1111 = vpop.f32.mrb[0].mxu0
    %v1112 = vadd.f32 0.0, %v1111
    %v1113 = vpop.f32.mrb[0].mxu0
    %1114 = vmatprep.mubr.f32.mxu0 0.0
    %1115 = vmatmul.mubr.f32.gmra.mrb[0].mxu0 %v1034
    %v1116 = vpop.f32.mrb[0].mxu0
    %v1117 = vadd.f32 0.0, %v1116
    %v1118 = vpop.f32.mrb[0].mxu0
    %1119 = vmatprep.mubr.f32.mxu0 0.0
    %1120 = vmatmul.mubr.f32.gmra.mrb[0].mxu0 %v1037
    %v1121 = vpop.f32.mrb[0].mxu0
    %v1122 = vadd.f32 0.0, %v1121
    %v1123 = vpop.f32.mrb[0].mxu0
    %1124 = vmatprep.mubr.f32.mxu0 0.0
    %1125 = vmatmul.mubr.f32.gmra.mrb[0].mxu0 %v1040
    %v1126 = vpop.f32.mrb[0].mxu0
    %v1127 = vadd.f32 0.0, %v1126
    %v1128 = vpop.f32.mrb[0].mxu0
    %1129 = vmatprep.mubr.f32.mxu0 0.0
    %1130 = vmatmul.mubr.f32.gmra.mrb[0].mxu0 %v1043
    %v1131 = vpop.f32.mrb[0].mxu0
    %v1132 = vadd.f32 0.0, %v1131
    %v1133 = vpop.f32.mrb[0].mxu0
    %1134 = vdwg.mxu0
    %v1135 = vsub.f32 %v1007, %v1112
    %v1136 = vsub.f32 %v1012, %v1117
    %v1137 = vsub.f32 %v1017, %v1122
    %v1138 = vsub.f32 %v1022, %v1127
    %v1139 = vsub.f32 %v1027, %v1132
    %1145 = vxpose.xlu0.b32.start [1/16] %v921, 128
    %1146 = vxpose.xlu0.b32.cont [2/16] %v923, 128
    %1147 = vxpose.xlu0.b32.cont [3/16] %v925, 128
    %1148 = vxpose.xlu0.b32.cont [4/16] %v927, 128
    %1149 = vxpose.xlu0.b32.cont [5/16] %v929, 128
    %1150 = vxpose.xlu0.b32.cont [6/16] 0.0, 128
    %1151 = vxpose.xlu0.b32.cont [7/16] 0.0, 128
    %1152 = vxpose.xlu0.b32.cont [8/16] 0.0, 128
    %1153 = vxpose.xlu0.b32.cont [9/16] 0.0, 128
    %1154 = vxpose.xlu0.b32.cont [10/16] 0.0, 128
    %1155 = vxpose.xlu0.b32.cont [11/16] 0.0, 128
    %1156 = vxpose.xlu0.b32.cont [12/16] 0.0, 128
    %1157 = vxpose.xlu0.b32.cont [13/16] 0.0, 128
    %1158 = vxpose.xlu0.b32.cont [14/16] 0.0, 128
    %1159 = vxpose.xlu0.b32.cont [15/16] 0.0, 128
    %1160 = vxpose.xlu0.b32.end [16/16] 0.0, 128
    %v1161 = vpop.trf.xlu0
    %v1162 = vpop.trf.xlu0
    %v1163 = vpop.trf.xlu0
    %v1164 = vpop.trf.xlu0
    %v1165 = vpop.trf.xlu0
    %v1166 = vpop.trf.xlu0
    %v1167 = vpop.trf.xlu0
    %v1168 = vpop.trf.xlu0
    %v1169 = vpop.trf.xlu0
    %v1170 = vpop.trf.xlu0
    %v1171 = vpop.trf.xlu0
    %v1172 = vpop.trf.xlu0
    %v1173 = vpop.trf.xlu0
    %v1174 = vpop.trf.xlu0
    %v1175 = vpop.trf.xlu0
    %v1176 = vpop.trf.xlu0
    %v1178 = vsel %vm283, %v1161, 0
    %v1181 = vsel %vm283, %v1162, 0
    %v1184 = vsel %vm283, %v1163, 0
    %1186 = vmatprep.subr.mxu0 0.0
    %1187 = vmatpush1.msra.mxu0 %v921
    %1188 = vmatprep.subr.mxu0 0.0
    %1189 = vmatpush1.msra.mxu0 %v923
    %1190 = vmatprep.subr.mxu0 0.0
    %1191 = vmatpush1.msra.mxu0 %v925
    %1192 = vmatprep.subr.mxu0 0.0
    %1193 = vmatpush1.msra.mxu0 %v927
    %1194 = vmatprep.subr.mxu0 0.0
    %1195 = vmatpush1.msra.mxu0 %v929
    %1196 = vmatprep.subr.mxu0 0.0
    %1197 = vmatpush1.msra.mxu0 0.0
    %1198 = vmatprep.subr.mxu0 0.0
    %1199 = vmatpush1.msra.mxu0 0.0
    %1200 = vmatprep.subr.mxu0 0.0
    %1201 = vmatpush1.msra.mxu0 0.0
    %1202 = vmatprep.subr.mxu0 0.0
    %1203 = vmatpush1.msra.mxu0 0.0
    %1204 = vmatprep.subr.mxu0 0.0
    %1205 = vmatpush1.msra.mxu0 0.0
    %1206 = vmatprep.subr.mxu0 0.0
    %1207 = vmatpush1.msra.mxu0 0.0
    %1208 = vmatprep.subr.mxu0 0.0
    %1209 = vmatpush1.msra.mxu0 0.0
    %1210 = vmatprep.subr.mxu0 0.0
    %1211 = vmatpush1.msra.mxu0 0.0
    %1212 = vmatprep.subr.mxu0 0.0
    %1213 = vmatpush1.msra.mxu0 0.0
    %1214 = vmatprep.subr.mxu0 0.0
    %1215 = vmatpush1.msra.mxu0 0.0
    %1216 = vmatprep.subr.mxu0 0.0
    %1217 = vmatpush1.msra.mxu0 0.0
    %1218 = vmatprep.subr.mxu0 0.0
    %1219 = vmatpush1.msra.mxu0 0.0
    %1220 = vmatprep.subr.mxu0 0.0
    %1221 = vmatpush1.msra.mxu0 0.0
    %1222 = vmatprep.subr.mxu0 0.0
    %1223 = vmatpush1.msra.mxu0 0.0
    %1224 = vmatprep.subr.mxu0 0.0
    %1225 = vmatpush1.msra.mxu0 0.0
    %1226 = vmatprep.subr.mxu0 0.0
    %1227 = vmatpush1.msra.mxu0 0.0
    %1228 = vmatprep.subr.mxu0 0.0
    %1229 = vmatpush1.msra.mxu0 0.0
    %1230 = vmatprep.subr.mxu0 0.0
    %1231 = vmatpush1.msra.mxu0 0.0
    %1232 = vmatprep.subr.mxu0 0.0
    %1233 = vmatpush1.msra.mxu0 0.0
    %1234 = vmatprep.subr.mxu0 0.0
    %1235 = vmatpush1.msra.mxu0 0.0
    %1236 = vmatprep.subr.mxu0 0.0
    %1237 = vmatpush1.msra.mxu0 0.0
    %1238 = vmatprep.subr.mxu0 0.0
    %1239 = vmatpush1.msra.mxu0 0.0
    %1240 = vmatprep.subr.mxu0 0.0
    %1241 = vmatpush1.msra.mxu0 0.0
    %1242 = vmatprep.subr.mxu0 0.0
    %1243 = vmatpush1.msra.mxu0 0.0
    %1244 = vmatprep.subr.mxu0 0.0
    %1245 = vmatpush1.msra.mxu0 0.0
    %1246 = vmatprep.subr.mxu0 0.0
    %1247 = vmatpush1.msra.mxu0 0.0
    %1248 = vmatprep.subr.mxu0 0.0
    %1249 = vmatpush1.msra.mxu0 0.0
    %1250 = vmatprep.mubr.f32.mxu0 0.0
    %1251 = vmatmul.mubr.f32.gmra.mrb[0].mxu0 %v1178
    %v1252 = vpop.f32.mrb[0].mxu0
    %v1253 = vadd.f32 0.0, %v1252
    %v1254 = vpop.f32.mrb[0].mxu0
    %1255 = vmatprep.mubr.f32.mxu0 0.0
    %1256 = vmatmul.mubr.f32.gmra.mrb[0].mxu0 %v1181
    %v1257 = vpop.f32.mrb[0].mxu0
    %v1258 = vadd.f32 0.0, %v1257
    %v1259 = vpop.f32.mrb[0].mxu0
    %1260 = vmatprep.mubr.f32.mxu0 0.0
    %1261 = vmatmul.mubr.f32.gmra.mrb[0].mxu0 %v1184
    %v1262 = vpop.f32.mrb[0].mxu0
    %v1263 = vadd.f32 0.0, %v1262
    %v1264 = vpop.f32.mrb[0].mxu0
    %1265 = vdwg.mxu0
    %1266 = vxpose.xlu0.b32.start [1/16] %v910, 128
    %1267 = vxpose.xlu0.b32.cont [2/16] %v911, 128
    %1268 = vxpose.xlu0.b32.cont [3/16] %v912, 128
    %1269 = vxpose.xlu0.b32.cont [4/16] %v913, 128
    %1270 = vxpose.xlu0.b32.cont [5/16] %v914, 128
    %1271 = vxpose.xlu0.b32.cont [6/16] 0.0, 128
    %1272 = vxpose.xlu0.b32.cont [7/16] 0.0, 128
    %1273 = vxpose.xlu0.b32.cont [8/16] 0.0, 128
    %1274 = vxpose.xlu0.b32.cont [9/16] 0.0, 128
    %1275 = vxpose.xlu0.b32.cont [10/16] 0.0, 128
    %1276 = vxpose.xlu0.b32.cont [11/16] 0.0, 128
    %1277 = vxpose.xlu0.b32.cont [12/16] 0.0, 128
    %1278 = vxpose.xlu0.b32.cont [13/16] 0.0, 128
    %1279 = vxpose.xlu0.b32.cont [14/16] 0.0, 128
    %1280 = vxpose.xlu0.b32.cont [15/16] 0.0, 128
    %1281 = vxpose.xlu0.b32.end [16/16] 0.0, 128
    %v1282 = vpop.trf.xlu0
    %v1283 = vpop.trf.xlu0
    %v1284 = vpop.trf.xlu0
    %v1285 = vpop.trf.xlu0
    %v1286 = vpop.trf.xlu0
    %v1287 = vpop.trf.xlu0
    %v1288 = vpop.trf.xlu0
    %v1289 = vpop.trf.xlu0
    %v1290 = vpop.trf.xlu0
    %v1291 = vpop.trf.xlu0
    %v1292 = vpop.trf.xlu0
    %v1293 = vpop.trf.xlu0
    %v1294 = vpop.trf.xlu0
    %v1295 = vpop.trf.xlu0
    %v1296 = vpop.trf.xlu0
    %v1297 = vpop.trf.xlu0
    %v1299 = vsel %vm283, %v1282, 0
    %v1302 = vsel %vm283, %v1283, 0
    %v1305 = vsel %vm283, %v1284, 0
    %1307 = vmatprep.subr.mxu0 0.0
    %1308 = vmatpush1.msra.mxu0 %v910
    %1309 = vmatprep.subr.mxu0 0.0
    %1310 = vmatpush1.msra.mxu0 %v911
    %1311 = vmatprep.subr.mxu0 0.0
    %1312 = vmatpush1.msra.mxu0 %v912
    %1313 = vmatprep.subr.mxu0 0.0
    %1314 = vmatpush1.msra.mxu0 %v913
    %1315 = vmatprep.subr.mxu0 0.0
    %1316 = vmatpush1.msra.mxu0 %v914
    %1317 = vmatprep.subr.mxu0 0.0
    %1318 = vmatpush1.msra.mxu0 0.0
    %1319 = vmatprep.subr.mxu0 0.0
    %1320 = vmatpush1.msra.mxu0 0.0
    %1321 = vmatprep.subr.mxu0 0.0
    %1322 = vmatpush1.msra.mxu0 0.0
    %1323 = vmatprep.subr.mxu0 0.0
    %1324 = vmatpush1.msra.mxu0 0.0
    %1325 = vmatprep.subr.mxu0 0.0
    %1326 = vmatpush1.msra.mxu0 0.0
    %1327 = vmatprep.subr.mxu0 0.0
    %1328 = vmatpush1.msra.mxu0 0.0
    %1329 = vmatprep.subr.mxu0 0.0
    %1330 = vmatpush1.msra.mxu0 0.0
    %1331 = vmatprep.subr.mxu0 0.0
    %1332 = vmatpush1.msra.mxu0 0.0
    %1333 = vmatprep.subr.mxu0 0.0
    %1334 = vmatpush1.msra.mxu0 0.0
    %1335 = vmatprep.subr.mxu0 0.0
    %1336 = vmatpush1.msra.mxu0 0.0
    %1337 = vmatprep.subr.mxu0 0.0
    %1338 = vmatpush1.msra.mxu0 0.0
    %1339 = vmatprep.subr.mxu0 0.0
    %1340 = vmatpush1.msra.mxu0 0.0
    %1341 = vmatprep.subr.mxu0 0.0
    %1342 = vmatpush1.msra.mxu0 0.0
    %1343 = vmatprep.subr.mxu0 0.0
    %1344 = vmatpush1.msra.mxu0 0.0
    %1345 = vmatprep.subr.mxu0 0.0
    %1346 = vmatpush1.msra.mxu0 0.0
    %1347 = vmatprep.subr.mxu0 0.0
    %1348 = vmatpush1.msra.mxu0 0.0
    %1349 = vmatprep.subr.mxu0 0.0
    %1350 = vmatpush1.msra.mxu0 0.0
    %1351 = vmatprep.subr.mxu0 0.0
    %1352 = vmatpush1.msra.mxu0 0.0
    %1353 = vmatprep.subr.mxu0 0.0
    %1354 = vmatpush1.msra.mxu0 0.0
    %1355 = vmatprep.subr.mxu0 0.0
    %1356 = vmatpush1.msra.mxu0 0.0
    %1357 = vmatprep.subr.mxu0 0.0
    %1358 = vmatpush1.msra.mxu0 0.0
    %1359 = vmatprep.subr.mxu0 0.0
    %1360 = vmatpush1.msra.mxu0 0.0
    %1361 = vmatprep.subr.mxu0 0.0
    %1362 = vmatpush1.msra.mxu0 0.0
    %1363 = vmatprep.subr.mxu0 0.0
    %1364 = vmatpush1.msra.mxu0 0.0
    %1365 = vmatprep.subr.mxu0 0.0
    %1366 = vmatpush1.msra.mxu0 0.0
    %1367 = vmatprep.subr.mxu0 0.0
    %1368 = vmatpush1.msra.mxu0 0.0
    %1369 = vmatprep.subr.mxu0 0.0
    %1370 = vmatpush1.msra.mxu0 0.0
    %1371 = vmatprep.mubr.f32.mxu0 0.0
    %1372 = vmatmul.mubr.f32.gmra.mrb[0].mxu0 %v1299
    %v1373 = vpop.f32.mrb[0].mxu0
    %v1374 = vadd.f32 0.0, %v1373
    %v1375 = vpop.f32.mrb[0].mxu0
    %1376 = vmatprep.mubr.f32.mxu0 0.0
    %1377 = vmatmul.mubr.f32.gmra.mrb[0].mxu0 %v1302
    %v1378 = vpop.f32.mrb[0].mxu0
    %v1379 = vadd.f32 0.0, %v1378
    %v1380 = vpop.f32.mrb[0].mxu0
    %1381 = vmatprep.mubr.f32.mxu0 0.0
    %1382 = vmatmul.mubr.f32.gmra.mrb[0].mxu0 %v1305
    %v1383 = vpop.f32.mrb[0].mxu0
    %v1384 = vadd.f32 0.0, %v1383
    %v1385 = vpop.f32.mrb[0].mxu0
    %1386 = vdwg.mxu0
    %v1387 = vsub.f32 %v1253, %v1374
    %v1388 = vsub.f32 %v1258, %v1379
    %v1389 = vsub.f32 %v1263, %v1384
    %v1390 = vmul.f32 %v1135, %v1135
    %v1391 = vmul.f32 %v1136, %v1136
    %v1392 = vmul.f32 %v1137, %v1137
    %v1393 = vmul.f32 %v1138, %v1138
    %v1394 = vmul.f32 %v1139, %v1139
    %v1395 = vsel %vm283, %v1390, 0.0
    %v1396 = vsel %vm283, %v1391, 0.0
    %v1397 = vadd.f32 %v1395, %v1396
    %v1398 = vsel %vm283, %v1392, 0.0
    %v1399 = vadd.f32 %v1397, %v1398
    %v1400 = vsel %vm283, %v1393, 0.0
    %v1401 = vadd.f32 %v1399, %v1400
    %v1402 = vsel %vm283, %v1394, 0.0
    %v1403 = vadd.f32 %v1401, %v1402
    %1404 = vadd.xlane.f32.xlu0 %v1403
    %v1405 = vpop.xlane.xlu0 %1404
    %v1406 = vrot.slane %v1405, 4
    %v1407 = vadd.f32 %v1405, %v1406
    %v1408 = vrot.slane %v1407, 2
    %v1409 = vadd.f32 %v1407, %v1408
    %v1410 = vrot.slane %v1409, 1
    %v1411 = vadd.f32 %v1409, %v1410
    %s1412 = vtos %v1411
    %v1413 = vmul.f32 %v1387, %v1387
    %v1414 = vmul.f32 %v1388, %v1388
    %v1415 = vmul.f32 %v1389, %v1389
    %v1416 = vsel %vm77, %v1413, 0.0
    %v1417 = vsel %vm77, %v1414, 0.0
    %v1418 = vadd.f32 %v1416, %v1417
    %vm1419 = vcmask 158720
    %v1420 = vsel %vm1419, %v1415, 0.0
    %v1421 = vadd.f32 %v1418, %v1420
    %1422 = vadd.xlane.f32.xlu0 %v1421
    %v1423 = vpop.xlane.xlu0 %1422
    %v1424 = vrot.slane %v1423, 4
    %v1425 = vadd.f32 %v1423, %v1424
    %v1426 = vrot.slane %v1425, 2
    %v1427 = vadd.f32 %v1425, %v1426
    %v1428 = vrot.slane %v1427, 1
    %v1429 = vadd.f32 %v1427, %v1428
    %s1430 = vtos %v1429
    %s1431 = sadd.f32 %s1412, %s1430
    %s1432 = sadd.f32 %s195, %s879
    %s1433 = sadd.f32 %s1432, %s238
    %s1434 = sadd.f32 %s1433, %s1431
    %s1435 = scalar_lea.smem [#allocation2], 0
    %1436 = sst [smem:[%s1435]] %s1434
    // Predicated region
    $region34: #{tpu_custom_call.1} parent=1 // pred_check
      _
    $region35: #{tpu_custom_call.1} parent=1 // pred_check_branch
      %1438 = sbr.rel (0) target = $region37
    $region36: #{tpu_custom_call.1} parent=1 // pred_region
      %s1440 = ssub.s32 16, 16
      %1441 = vsyncadd [#allocation3], %s1440
      %1444 = dma.smem_to_hbm [#allocation2], 16, %s8, [#allocation3]
    $region37: #{tpu_custom_call.1} parent=1 // pred_fallthru
      _
    // Predicated region
    $region38: #{tpu_custom_call.1} parent=1 // pred_check
      _
    $region39: #{tpu_custom_call.1} parent=1 // pred_check_branch
      %1446 = sbr.rel (0) target = $region41
    $region40: #{tpu_custom_call.1} parent=1 // pred_region
      %1447 = dma.done [#allocation3], 16
    $region41: #{tpu_custom_call.1} parent=1 // pred_fallthru
      _
    %1448 = sfence
    %1449 = vsyncpa [#allocation3], 1

</llo_original>
